<compile_context>
chip_gen: v7x
topology: tpu7x:2x2x1
jax: 0.10.0
libtpu: 0.0.40
codegen_flags: <defaults>
</compile_context>

<pallas_src>
import math

import jax
import jax.numpy as jnp
from jax.experimental import pallas as pl
from jax.experimental.pallas import tpu as pltpu

EPS = 1e-5
LANE = 128
_TAPS = [(dy, dx) for dy in range(3) for dx in range(3)]   # tap t = dy*3 + dx (HWIO reshape order)


def _round_up(v, m):
    return (v + m - 1) // m * m


def _ce(flops, nbytes):
    return pl.CostEstimate(flops=int(flops), transcendentals=0, bytes_accessed=int(nbytes))


def _cparams(block_bytes, scratch_bytes=0):
    # double-buffered blocks + scratch + headroom; v5e default scoped limit is 16 MiB.
    need = 2 * int(block_bytes) + int(scratch_bytes) + (4 << 20)
    limit = min(max(need, 32 << 20), 100 << 20)
    return pltpu.CompilerParams(dimension_semantics=("parallel",), vmem_limit_bytes=limit)


# ----------------------------------------------------------------------------- core (NHWC)
def basic_block_forward_nhwc(x, gate, params, stride, gate_idx):
    """relu(bn2(conv2(relu(bn1(conv1(x))))) * gate + shortcut(x)), NHWC in/out."""
    N, H, W, Cin = x.shape
    Cout = params["w2"].shape[-1]
    Cinp = _round_up(Cin, LANE)
    Cp = _round_up(Cout, LANE)
    s = int(stride)
    Ho = (H + 2 - 3) // s + 1
    Wo = (W + 2 - 3) // s + 1
    R = N * Ho * Wo
    M = Ho * Wo
    use_proj = Cin != Cout
    if not use_proj:
        # identity shortcut is only shape-valid for stride == 1 (same as PyTorch module)
        assert s == 1, "identity shortcut requires stride == 1"
        assert Cinp == Cp

    # ---- channel-pad + spatial-pad + stride-phase-split the input, bf16 in HBM.
    #      phase[(a, b)][n, r, c] = xp[n, a + s*r, b + s*c]
    xb = x.astype(jnp.bfloat16)
    xc = jnp.pad(xb, ((0, 0), (0, 0), (0, 0), (0, Cinp - Cin)))        # (N, H, W, Cinp) bf16
    xp = jnp.pad(xc, ((0, 0), (1, 1), (1, 1), (0, 0)))                 # (N, H+2, W+2, Cinp)
    phases = [xp[:, a::s, b::s, :] for a in range(s) for b in range(s)]
    Hph = max(p.shape[1] for p in phases)
    Wph = max(p.shape[2] for p in phases)
    phases = [jnp.pad(p, ((0, 0), (0, Hph - p.shape[1]), (0, Wph - p.shape[2]), (0, 0)))
              for p in phases]
    xph = jnp.stack(phases, axis=0)                                    # (s*s, N, Hph, Wph, Cinp)
    P2 = s * s

    # ---- weights: HWIO, channel-padded, flattened to the im2col K layout, bf16 (MXU operands)
    def prep_w3x3(w, ci):
        cip = _round_up(ci, LANE)
        w = jnp.pad(w, ((0, 0), (0, 0), (0, cip - ci), (0, Cp - w.shape[-1])))
        return w.reshape(9 * cip, Cp).astype(jnp.bfloat16)

    w1 = prep_w3x3(params["w1"], Cin)                                  # (9*Cinp, Cp) bf16
    w2 = prep_w3x3(params["w2"], Cout)                                 # (9*Cp,   Cp) bf16

    # ---- block specs (grid over images; "parallel" => megacore sharding on v7x)
    x_spec = pl.BlockSpec((P2, 1, Hph, Wph, Cinp), lambda n: (0, n, 0, 0, 0))
    img_spec = pl.BlockSpec((1, Ho, Wo, Cp), lambda n: (n, 0, 0, 0))
    stat_spec = pl.BlockSpec((1, 2, Cp), lambda n: (n, 0, 0))
    affine_spec = pl.BlockSpec((1, Cp), lambda n: (0, 0))
    gate_spec = pl.BlockSpec((1, 1, Cp), lambda n: (n, 0, 0))
    w1_spec = pl.BlockSpec((9 * Cinp, Cp), lambda n: (0, 0))
    w2_spec = pl.BlockSpec((9 * Cp, Cp), lambda n: (0, 0))

    def _sum_stats(z):
        # per-image partial (sum, sum of squares) over rows -> (2, Cp), f32
        return jnp.concatenate([jnp.sum(z, axis=0, keepdims=True),
                                jnp.sum(z * z, axis=0, keepdims=True)], axis=0)

    # --------------------------------------------------------------- stage 1: conv1 (+1x1 shortcut)
    def make_stage1(with_proj):
        def kernel(xph_ref, w1_ref, *rest):
            if with_proj:
                ws_ref, z1_ref, st1_ref, zs_ref, sts_ref, im_ref = rest
            else:
                z1_ref, st1_ref, im_ref = rest
            # Build a contiguous im2col tile in VMEM; one matmul with K = 9*Cinp
            # accumulates inside the MXU (no per-tap f32 accumulator RMW passes).
            for t, (dy, dx) in enumerate(_TAPS):
                p = (dy % s) * s + (dx % s)
                xt = xph_ref[p, 0, dy // s:dy // s + Ho, dx // s:dx // s + Wo, :]
                im_ref[:, t * Cinp:(t + 1) * Cinp] = xt.reshape(M, Cinp)
            acc = jnp.dot(im_ref[...], w1_ref[...], preferred_element_type=jnp.float32)
            z1_ref[0] = acc.reshape(Ho, Wo, Cp).astype(z1_ref.dtype)
            st1_ref[0] = _sum_stats(acc)
            if with_proj:
                # 1x1 stride-s shortcut conv == the centre-tap columns of the im2col tile.
                # TODO(synk): on v6e/v7x concatenate ws with the centre-tap weight columns
                # (N = 2*Cp) to fill the 256-wide MXU when Cp == 128.
                xs = im_ref[:, 4 * Cinp:5 * Cinp]
                sc = jnp.dot(xs, ws_ref[...], preferred_element_type=jnp.float32)
                zs_ref[0] = sc.reshape(Ho, Wo, Cp).astype(zs_ref.dtype)
                sts_ref[0] = _sum_stats(sc)
        return kernel

    in1 = [xph, w1]
    in_specs1 = [x_spec, w1_spec]
    out_shape1 = [jax.ShapeDtypeStruct((N, Ho, Wo, Cp), jnp.bfloat16),
                  jax.ShapeDtypeStruct((N, 2, Cp), jnp.float32)]
    out_specs1 = [img_spec, stat_spec]
    blk1 = P2 * Hph * Wph * Cinp * 2 + 9 * Cinp * Cp * 2 + M * Cp * 2 + 2 * Cp * 4
    scratch1 = M * 9 * Cinp * 2
    flops1 = 2 * R * 9 * Cinp * Cp
    bytes1 = xph.size * 2 + w1.size * 2 + R * Cp * 2 + N * 2 * Cp * 4
    if use_proj:
        ws = jnp.pad(params["ws"], ((0, 0), (0, 0), (0, Cinp - Cin), (0, Cp - Cout)))
        ws = ws.reshape(Cinp, Cp).astype(jnp.bfloat16)
        in1.append(ws)
        in_specs1.append(pl.BlockSpec((Cinp, Cp), lambda n: (0, 0)))
        out_shape1 += [jax.ShapeDtypeStruct((N, Ho, Wo, Cp), jnp.bfloat16),
                       jax.ShapeDtypeStruct((N, 2, Cp), jnp.float32)]
        out_specs1 += [img_spec, stat_spec]
        blk1 += Cinp * Cp * 2 + M * Cp * 2 + 2 * Cp * 4
        flops1 += 2 * R * Cinp * Cp
        bytes1 += Cinp * Cp * 2 + R * Cp * 2 + N * 2 * Cp * 4

    outs1 = pl.pallas_call(
        make_stage1(use_proj),
        out_shape=tuple(out_shape1),
        grid=(N,),
        in_specs=in_specs1,
        out_specs=tuple(out_specs1),
        scratch_shapes=[pltpu.VMEM((M, 9 * Cinp), jnp.bfloat16)],
        compiler_params=_cparams(blk1, scratch1),
        cost_estimate=_ce(flops1, bytes1),
    )(*in1)
    if use_proj:
        z1, st1, zs, sts = outs1
    else:
        z1, st1 = outs1

    # ---- fold batch statistics (global over all N*Ho*Wo rows) into scale/shift (tiny XLA)
    # TODO(synk): for very large R merge per-image (count, mean, M2) Welford-style; the
    # one-pass E[z^2] - mean^2 form can cancel in f32.
    def bn_fold(st, gamma, beta):
        tot = jnp.sum(st, axis=0)                                      # (2, Cp)
        mean = tot[0] / float(R)
        var = jnp.maximum(tot[1] / float(R) - mean * mean, 0.0)
        inv = jax.lax.rsqrt(var + EPS)
        gamma_p = jnp.pad(gamma, (0, Cp - Cout))                       # pad with 0 -> padded lanes stay 0
        beta_p = jnp.pad(beta, (0, Cp - Cout))
        scale = gamma_p * inv
        shift = beta_p - mean * scale
        return scale.reshape(1, Cp), shift.reshape(1, Cp)

    scale1, shift1 = bn_fold(st1, params["bn1_gamma"], params["bn1_beta"])

    # --------------------------------------------------------------- stage 2: bn1+relu fused with conv2
    def stage2_kernel(z1_ref, s1_ref, b1_ref, w2_ref, z2_ref, st2_ref, y1p_ref, im2_ref):
        y1 = jnp.maximum(z1_ref[0].astype(jnp.float32) * s1_ref[...] + b1_ref[...], 0.0)
        # zero only the 1-px halo strips (scratch is uninitialised; zero-once under
        # pl.when(program_id==0) is unsafe when the grid is megacore-sharded).
        y1p_ref[0:1, :, :] = jnp.zeros((1, Wo + 2, Cp), jnp.bfloat16)
        y1p_ref[Ho + 1:Ho + 2, :, :] = jnp.zeros((1, Wo + 2, Cp), jnp.bfloat16)
        y1p_ref[:, 0:1, :] = jnp.zeros((Ho + 2, 1, Cp), jnp.bfloat16)
        y1p_ref[:, Wo + 1:Wo + 2, :] = jnp.zeros((Ho + 2, 1, Cp), jnp.bfloat16)
        y1p_ref[1:Ho + 1, 1:Wo + 1, :] = y1.astype(jnp.bfloat16)       # y1 never touches HBM
        for t, (dy, dx) in enumerate(_TAPS):
            win = y1p_ref[dy:dy + Ho, dx:dx + Wo, :]
            im2_ref[:, t * Cp:(t + 1) * Cp] = win.reshape(M, Cp)
        acc = jnp.dot(im2_ref[...], w2_ref[...], preferred_element_type=jnp.float32)
        z2_ref[0] = acc.reshape(Ho, Wo, Cp).astype(z2_ref.dtype)
        st2_ref[0] = _sum_stats(acc)

    blk2 = 2 * M * Cp * 2 + 9 * Cp * Cp * 2 + 2 * Cp * 4 + 2 * 1 * Cp * 4
    scratch2 = (Ho + 2) * (Wo + 2) * Cp * 2 + M * 9 * Cp * 2
    z2, st2 = pl.pallas_call(
        stage2_kernel,
        out_shape=(jax.ShapeDtypeStruct((N, Ho, Wo, Cp), jnp.bfloat16),
                   jax.ShapeDtypeStruct((N, 2, Cp), jnp.float32)),
        grid=(N,),
        in_specs=[img_spec, affine_spec, affine_spec, w2_spec],
        out_specs=(img_spec, stat_spec),
        scratch_shapes=[pltpu.VMEM((Ho + 2, Wo + 2, Cp), jnp.bfloat16),
                        pltpu.VMEM((M, 9 * Cp), jnp.bfloat16)],
        compiler_params=_cparams(blk2, scratch2),
        cost_estimate=_ce(2 * R * 9 * Cp * Cp + 5 * R * Cp,
                          2 * R * Cp * 2 + w2.size * 2 + N * 2 * Cp * 4 + 2 * Cp * 4),
    )(z1, scale1, shift1, w2)

    scale2, shift2 = bn_fold(st2, params["bn2_gamma"], params["bn2_beta"])

    # gate slice, lane-padded (zeros), broadcast happens in-kernel (no (R, Cout) HBM broadcast)
    g = gate[:, gate_idx:gate_idx + Cout].astype(jnp.float32)
    g = jnp.pad(g, ((0, 0), (0, Cp - Cout))).reshape(N, 1, Cp)

    # --------------------------------------------------------------- stage 3: bn2 * gate + shortcut, relu
    if use_proj:
        scale_s, shift_s = bn_fold(sts, params["bns_gamma"], params["bns_beta"])

        def stage3_kernel(z2_ref, s2_ref, b2_ref, g_ref, zs_ref, ss_ref, bs_ref, o_ref):
            y = (z2_ref[0].astype(jnp.float32) * s2_ref[...] + b2_ref[...]) * g_ref[0]
            sc = zs_ref[0].astype(jnp.float32) * ss_ref[...] + bs_ref[...]
            o_ref[0] = jnp.maximum(y + sc, 0.0).astype(o_ref.dtype)

        blk3 = 3 * M * Cp * 2 + 5 * Cp * 4
        out = pl.pallas_call(
            stage3_kernel,
            out_shape=jax.ShapeDtypeStruct((N, Ho, Wo, Cp), jnp.bfloat16),
            grid=(N,),
            in_specs=[img_spec, affine_spec, affine_spec, gate_spec,
                      img_spec, affine_spec, affine_spec],
            out_specs=img_spec,
            compiler_params=_cparams(blk3),
            cost_estimate=_ce(6 * R * Cp, 3 * R * Cp * 2 + N * Cp * 4 + 4 * Cp * 4),
        )(z2, scale2, shift2, g, zs, scale_s, shift_s)
    else:
        # identity shortcut: reuse the small channel-padded bf16 copy of x (no re-read of the
        # whole phase-split padded input just for its interior).  Here Ho == H, Wo == W, Cp == Cinp.
        x_sc = xc

        def stage3_kernel(z2_ref, s2_ref, b2_ref, g_ref, xsc_ref, o_ref):
            y = (z2_ref[0].astype(jnp.float32) * s2_ref[...] + b2_ref[...]) * g_ref[0]
            o_ref[0] = jnp.maximum(y + xsc_ref[0].astype(jnp.float32), 0.0).astype(o_ref.dtype)

        blk3 = 3 * M * Cp * 2 + 3 * Cp * 4
        out = pl.pallas_call(
            stage3_kernel,
            out_shape=jax.ShapeDtypeStruct((N, Ho, Wo, Cp), jnp.bfloat16),
            grid=(N,),
            in_specs=[img_spec, affine_spec, affine_spec, gate_spec, img_spec],
            out_specs=img_spec,
            compiler_params=_cparams(blk3),
            cost_estimate=_ce(5 * R * Cp, 3 * R * Cp * 2 + N * Cp * 4 + 2 * Cp * 4),
        )(z2, scale2, shift2, g, x_sc)

    # TODO(synk): in a full network keep activations padded-NHWC bf16 end-to-end and
    # drop this slice (and the NCHW<->NHWC transposes in the wrapper below).
    return out[:, :, :, :Cout]


# ----------------------------------------------------------------------------- PyTorch-facing wrapper
def basic_block_forward(x_gate, params, stride, gate_idx):
    """Pallas implementation of BasicBlock.forward([x, gate]) (NCHW interface)."""
    x_nchw, gate = x_gate
    # TODO(synk): per-block transposes are pure HBM shuffles XLA cannot fuse into the
    # custom calls; drop them by keeping NHWC activations across the whole network.
    x = jnp.transpose(x_nchw, (0, 2, 3, 1)).astype(jnp.float32)
    y = basic_block_forward_nhwc(x, gate, params, stride, gate_idx)
    return [jnp.transpose(y, (0, 3, 1, 2)).astype(jnp.float32), gate]


# ----------------------------------------------------------------------------- reference (plain JAX)
def reference_forward(x_gate, params, stride, gate_idx, matmul_dtype=jnp.float32):
    x_nchw, gate = x_gate
    x = jnp.transpose(x_nchw, (0, 2, 3, 1)).astype(jnp.float32)

    def conv(v, w, s, pad):
        return jax.lax.conv_general_dilated(
            v.astype(matmul_dtype), w.astype(matmul_dtype), (s, s),
            [(pad, pad), (pad, pad)],
            dimension_numbers=("NHWC", "HWIO", "NHWC"),
            preferred_element_type=jnp.float32,
            precision=jax.lax.Precision.HIGHEST)

    def bn(z, g, b):
        mean = jnp.mean(z, axis=(0, 1, 2), keepdims=True)
        var = jnp.mean((z - mean) ** 2, axis=(0, 1, 2), keepdims=True)
        return (z - mean) * jax.lax.rsqrt(var + EPS) * g + b

    Cin = params["w1"].shape[2]
    Cout = params["w2"].shape[-1]
    y = jax.nn.relu(bn(conv(x, params["w1"], stride, 1),
                       params["bn1_gamma"], params["bn1_beta"]))
    y = bn(conv(y, params["w2"], 1, 1), params["bn2_gamma"], params["bn2_beta"])
    y = y * gate[:, gate_idx:gate_idx + Cout][:, None, None, :]
    if Cin != Cout:
        sc = bn(conv(x, params["ws"], stride, 0),
                params["bns_gamma"], params["bns_beta"])
    else:
        sc = x
    return jnp.transpose(jax.nn.relu(y + sc), (0, 3, 1, 2))


# ----------------------------------------------------------------------------- params
def init_params(key, in_channels, out_channels):
    ks = jax.random.split(key, 10)

    def conv_init(k, shape):
        fan_in = shape[0] * shape[1] * shape[2]
        return jax.random.normal(k, shape, jnp.float32) / math.sqrt(fan_in)

    p = {
        "w1": conv_init(ks[0], (3, 3, in_channels, out_channels)),     # HWIO
        "w2": conv_init(ks[1], (3, 3, out_channels, out_channels)),
        "bn1_gamma": 1.0 + 0.1 * jax.random.normal(ks[2], (out_channels,), jnp.float32),
        "bn1_beta": 0.1 * jax.random.normal(ks[3], (out_channels,), jnp.float32),
        "bn2_gamma": 1.0 + 0.1 * jax.random.normal(ks[4], (out_channels,), jnp.float32),
        "bn2_beta": 0.1 * jax.random.normal(ks[5], (out_channels,), jnp.float32),
    }
    if in_channels != out_channels:
        p["ws"] = conv_init(ks[6], (1, 1, in_channels, out_channels))
        p["bns_gamma"] = 1.0 + 0.1 * jax.random.normal(ks[7], (out_channels,), jnp.float32)
        p["bns_beta"] = 0.1 * jax.random.normal(ks[8], (out_channels,), jnp.float32)
    return p


# ----------------------------------------------------------------------------- main
if __name__ == "__main__":
    key = jax.random.PRNGKey(0)
    kx, kg, kp1, kp2 = jax.random.split(key, 4)

    # Case 1: projection shortcut (in_channels != out_channels, stride 2), gate_idx = 2
    N, Cin, Cout, H, W = 2, 4, 8, 16, 16
    stride, gate_idx, G = 2, 2, 16
    x = jax.random.normal(kx, (N, Cin, H, W), jnp.float32)
    gate = jax.random.uniform(kg, (N, G), jnp.float32, 0.5, 1.5)
    params = init_params(kp1, Cin, Cout)

    y, gate_out = basic_block_forward([x, gate], params, stride, gate_idx)
    y = jax.block_until_ready(y)
    assert y.shape == (N, Cout, H // stride, W // stride), y.shape
    assert jnp.array_equal(gate_out, gate)

    # Check vs. a reference that also uses bf16 MXU operands (matches kernel intent);
    # bf16 storage of the stage boundaries adds a little extra rounding.
    y_bf = reference_forward([x, gate], params, stride, gate_idx, jnp.bfloat16)
    assert jnp.allclose(y, y_bf, rtol=2e-2, atol=3e-2), float(jnp.max(jnp.abs(y - y_bf)))
    # Looser sanity check vs. the full-f32 reference.
    y_f32 = reference_forward([x, gate], params, stride, gate_idx, jnp.float32)
    assert jnp.allclose(y, y_f32, rtol=3e-2, atol=5e-2), float(jnp.max(jnp.abs(y - y_f32)))

    # Case 2: identity shortcut (in_channels == out_channels, stride 1), gate_idx = 0
    params2 = init_params(kp2, Cout, Cout)
    x2 = jnp.asarray(y)                               # (2, 8, 8, 8) NCHW
    y2, _ = basic_block_forward([x2, gate], params2, 1, 0)
    y2 = jax.block_until_ready(y2)
    y2_bf = reference_forward([x2, gate], params2, 1, 0, jnp.bfloat16)
    assert jnp.allclose(y2, y2_bf, rtol=2e-2, atol=3e-2), float(jnp.max(jnp.abs(y2 - y2_bf)))
    y2_f32 = reference_forward([x2, gate], params2, 1, 0, jnp.float32)
    assert jnp.allclose(y2, y2_f32, rtol=3e-2, atol=5e-2), float(jnp.max(jnp.abs(y2 - y2_f32)))

    print("KERNEL_OK")
</pallas_src>

<mosaic_0001>
module attributes {stable_mosaic.version = 11 : i64} {
  func.func @kernel(%arg0: i32, %arg1: memref<4x1x9x9x128xbf16, #tpu.memory_space<vmem>>, %arg2: memref<1152x128xbf16, #tpu.memory_space<vmem>>, %arg3: memref<128x128xbf16, #tpu.memory_space<vmem>>, %arg4: memref<1x8x8x128xbf16, #tpu.memory_space<vmem>>, %arg5: memref<1x2x128xf32, #tpu.memory_space<vmem>>, %arg6: memref<1x8x8x128xbf16, #tpu.memory_space<vmem>>, %arg7: memref<1x2x128xf32, #tpu.memory_space<vmem>>, %arg8: memref<64x1152xbf16, #tpu.memory_space<vmem>>) attributes {dimension_semantics = [#tpu.dimension_semantics<parallel>], iteration_bounds = array<i64: 2>, scalar_prefetch = 0 : i64, scratch_operands = 1 : i64, tpu.core_type = #tpu.core_type<tc>, window_params = [{transform_indices = @transform_0, window_bounds = array<i64: 4, 1, 9, 9, 128>}, {pipeline_mode = #tpu.pipeline_mode<synchronous>, transform_indices = @transform_1, window_bounds = array<i64: 1152, 128>}, {pipeline_mode = #tpu.pipeline_mode<synchronous>, transform_indices = @transform_2, window_bounds = array<i64: 128, 128>}, {transform_indices = @transform_3, window_bounds = array<i64: 1, 8, 8, 128>}, {transform_indices = @transform_4, window_bounds = array<i64: 1, 2, 128>}, {transform_indices = @transform_5, window_bounds = array<i64: 1, 8, 8, 128>}, {transform_indices = @transform_6, window_bounds = array<i64: 1, 2, 128>}]} {
    %c0 = arith.constant 0 : index
    %c0_0 = arith.constant 0 : index
    %c0_1 = arith.constant 0 : index
    %c0_2 = arith.constant 0 : index
    %c0_3 = arith.constant 0 : index
    %0 = vector.load %arg1[%c0, %c0_0, %c0_1, %c0_2, %c0_3] : memref<4x1x9x9x128xbf16, #tpu.memory_space<vmem>>, vector<1x1x8x8x128xbf16>
    %1 = vector.shape_cast %0 : vector<1x1x8x8x128xbf16> to vector<8x8x128xbf16>
    %2 = vector.shape_cast %1 : vector<8x8x128xbf16> to vector<64x128xbf16>
    %c0_4 = arith.constant 0 : index
    %c0_5 = arith.constant 0 : index
    %3 = vector.load %arg8[%c0_4, %c0_5] : memref<64x1152xbf16, #tpu.memory_space<vmem>>, vector<64x128xbf16>
    tpu.vector_store %arg8[%c0_4, %c0_5], %2 {strides = array<i32>} : memref<64x1152xbf16, #tpu.memory_space<vmem>>, vector<64x128xbf16>,
    %c1 = arith.constant 1 : index
    %c0_6 = arith.constant 0 : index
    %c0_7 = arith.constant 0 : index
    %c0_8 = arith.constant 0 : index
    %c0_9 = arith.constant 0 : index
    %4 = vector.load %arg1[%c1, %c0_6, %c0_7, %c0_8, %c0_9] : memref<4x1x9x9x128xbf16, #tpu.memory_space<vmem>>, vector<1x1x8x8x128xbf16>
    %5 = vector.shape_cast %4 : vector<1x1x8x8x128xbf16> to vector<8x8x128xbf16>
    %6 = vector.shape_cast %5 : vector<8x8x128xbf16> to vector<64x128xbf16>
    %c0_10 = arith.constant 0 : index
    %c128 = arith.constant 128 : index
    %7 = vector.load %arg8[%c0_10, %c128] : memref<64x1152xbf16, #tpu.memory_space<vmem>>, vector<64x128xbf16>
    tpu.vector_store %arg8[%c0_10, %c128], %6 {strides = array<i32>} : memref<64x1152xbf16, #tpu.memory_space<vmem>>, vector<64x128xbf16>,
    %c0_11 = arith.constant 0 : index
    %c0_12 = arith.constant 0 : index
    %c0_13 = arith.constant 0 : index
    %c1_14 = arith.constant 1 : index
    %c0_15 = arith.constant 0 : index
    %8 = vector.load %arg1[%c0_11, %c0_12, %c0_13, %c1_14, %c0_15] : memref<4x1x9x9x128xbf16, #tpu.memory_space<vmem>>, vector<1x1x8x8x128xbf16>
    %9 = vector.shape_cast %8 : vector<1x1x8x8x128xbf16> to vector<8x8x128xbf16>
    %10 = vector.shape_cast %9 : vector<8x8x128xbf16> to vector<64x128xbf16>
    %c0_16 = arith.constant 0 : index
    %c256 = arith.constant 256 : index
    %11 = vector.load %arg8[%c0_16, %c256] : memref<64x1152xbf16, #tpu.memory_space<vmem>>, vector<64x128xbf16>
    tpu.vector_store %arg8[%c0_16, %c256], %10 {strides = array<i32>} : memref<64x1152xbf16, #tpu.memory_space<vmem>>, vector<64x128xbf16>,
    %c2 = arith.constant 2 : index
    %c0_17 = arith.constant 0 : index
    %c0_18 = arith.constant 0 : index
    %c0_19 = arith.constant 0 : index
    %c0_20 = arith.constant 0 : index
    %12 = vector.load %arg1[%c2, %c0_17, %c0_18, %c0_19, %c0_20] : memref<4x1x9x9x128xbf16, #tpu.memory_space<vmem>>, vector<1x1x8x8x128xbf16>
    %13 = vector.shape_cast %12 : vector<1x1x8x8x128xbf16> to vector<8x8x128xbf16>
    %14 = vector.shape_cast %13 : vector<8x8x128xbf16> to vector<64x128xbf16>
    %c0_21 = arith.constant 0 : index
    %c384 = arith.constant 384 : index
    %15 = vector.load %arg8[%c0_21, %c384] : memref<64x1152xbf16, #tpu.memory_space<vmem>>, vector<64x128xbf16>
    tpu.vector_store %arg8[%c0_21, %c384], %14 {strides = array<i32>} : memref<64x1152xbf16, #tpu.memory_space<vmem>>, vector<64x128xbf16>,
    %c3 = arith.constant 3 : index
    %c0_22 = arith.constant 0 : index
    %c0_23 = arith.constant 0 : index
    %c0_24 = arith.constant 0 : index
    %c0_25 = arith.constant 0 : index
    %16 = vector.load %arg1[%c3, %c0_22, %c0_23, %c0_24, %c0_25] : memref<4x1x9x9x128xbf16, #tpu.memory_space<vmem>>, vector<1x1x8x8x128xbf16>
    %17 = vector.shape_cast %16 : vector<1x1x8x8x128xbf16> to vector<8x8x128xbf16>
    %18 = vector.shape_cast %17 : vector<8x8x128xbf16> to vector<64x128xbf16>
    %c0_26 = arith.constant 0 : index
    %c512 = arith.constant 512 : index
    %19 = vector.load %arg8[%c0_26, %c512] : memref<64x1152xbf16, #tpu.memory_space<vmem>>, vector<64x128xbf16>
    tpu.vector_store %arg8[%c0_26, %c512], %18 {strides = array<i32>} : memref<64x1152xbf16, #tpu.memory_space<vmem>>, vector<64x128xbf16>,
    %c2_27 = arith.constant 2 : index
    %c0_28 = arith.constant 0 : index
    %c0_29 = arith.constant 0 : index
    %c1_30 = arith.constant 1 : index
    %c0_31 = arith.constant 0 : index
    %20 = vector.load %arg1[%c2_27, %c0_28, %c0_29, %c1_30, %c0_31] : memref<4x1x9x9x128xbf16, #tpu.memory_space<vmem>>, vector<1x1x8x8x128xbf16>
    %21 = vector.shape_cast %20 : vector<1x1x8x8x128xbf16> to vector<8x8x128xbf16>
    %22 = vector.shape_cast %21 : vector<8x8x128xbf16> to vector<64x128xbf16>
    %c0_32 = arith.constant 0 : index
    %c640 = arith.constant 640 : index
    %23 = vector.load %arg8[%c0_32, %c640] : memref<64x1152xbf16, #tpu.memory_space<vmem>>, vector<64x128xbf16>
    tpu.vector_store %arg8[%c0_32, %c640], %22 {strides = array<i32>} : memref<64x1152xbf16, #tpu.memory_space<vmem>>, vector<64x128xbf16>,
    %c0_33 = arith.constant 0 : index
    %c0_34 = arith.constant 0 : index
    %c1_35 = arith.constant 1 : index
    %c0_36 = arith.constant 0 : index
    %c0_37 = arith.constant 0 : index
    %24 = vector.load %arg1[%c0_33, %c0_34, %c1_35, %c0_36, %c0_37] : memref<4x1x9x9x128xbf16, #tpu.memory_space<vmem>>, vector<1x1x8x8x128xbf16>
    %25 = vector.shape_cast %24 : vector<1x1x8x8x128xbf16> to vector<8x8x128xbf16>
    %26 = vector.shape_cast %25 : vector<8x8x128xbf16> to vector<64x128xbf16>
    %c0_38 = arith.constant 0 : index
    %c768 = arith.constant 768 : index
    %27 = vector.load %arg8[%c0_38, %c768] : memref<64x1152xbf16, #tpu.memory_space<vmem>>, vector<64x128xbf16>
    tpu.vector_store %arg8[%c0_38, %c768], %26 {strides = array<i32>} : memref<64x1152xbf16, #tpu.memory_space<vmem>>, vector<64x128xbf16>,
    %c1_39 = arith.constant 1 : index
    %c0_40 = arith.constant 0 : index
    %c1_41 = arith.constant 1 : index
    %c0_42 = arith.constant 0 : index
    %c0_43 = arith.constant 0 : index
    %28 = vector.load %arg1[%c1_39, %c0_40, %c1_41, %c0_42, %c0_43] : memref<4x1x9x9x128xbf16, #tpu.memory_space<vmem>>, vector<1x1x8x8x128xbf16>
    %29 = vector.shape_cast %28 : vector<1x1x8x8x128xbf16> to vector<8x8x128xbf16>
    %30 = vector.shape_cast %29 : vector<8x8x128xbf16> to vector<64x128xbf16>
    %c0_44 = arith.constant 0 : index
    %c896 = arith.constant 896 : index
    %31 = vector.load %arg8[%c0_44, %c896] : memref<64x1152xbf16, #tpu.memory_space<vmem>>, vector<64x128xbf16>
    tpu.vector_store %arg8[%c0_44, %c896], %30 {strides = array<i32>} : memref<64x1152xbf16, #tpu.memory_space<vmem>>, vector<64x128xbf16>,
    %c0_45 = arith.constant 0 : index
    %c0_46 = arith.constant 0 : index
    %c1_47 = arith.constant 1 : index
    %c1_48 = arith.constant 1 : index
    %c0_49 = arith.constant 0 : index
    %32 = vector.load %arg1[%c0_45, %c0_46, %c1_47, %c1_48, %c0_49] : memref<4x1x9x9x128xbf16, #tpu.memory_space<vmem>>, vector<1x1x8x8x128xbf16>
    %33 = vector.shape_cast %32 : vector<1x1x8x8x128xbf16> to vector<8x8x128xbf16>
    %34 = vector.shape_cast %33 : vector<8x8x128xbf16> to vector<64x128xbf16>
    %c0_50 = arith.constant 0 : index
    %c1024 = arith.constant 1024 : index
    %35 = vector.load %arg8[%c0_50, %c1024] : memref<64x1152xbf16, #tpu.memory_space<vmem>>, vector<64x128xbf16>
    tpu.vector_store %arg8[%c0_50, %c1024], %34 {strides = array<i32>} : memref<64x1152xbf16, #tpu.memory_space<vmem>>, vector<64x128xbf16>,
    %c0_51 = arith.constant 0 : index
    %c0_52 = arith.constant 0 : index
    %36 = vector.load %arg8[%c0_51, %c0_52] : memref<64x1152xbf16, #tpu.memory_space<vmem>>, vector<64x1152xbf16>
    %c0_53 = arith.constant 0 : index
    %c0_54 = arith.constant 0 : index
    %37 = vector.load %arg2[%c0_53, %c0_54] : memref<1152x128xbf16, #tpu.memory_space<vmem>>, vector<1152x128xbf16>
    %cst = arith.constant dense<0.000000e+00> : vector<64x128xf32>
    %38 = tpu.matmul %36, %37, %cst {dimension_numbers = #tpu.dot_dimension_numbers<[1], [0], [0], [1], [0, 0, 1, 1], [], []>} : vector<64x1152xbf16>, vector<1152x128xbf16>, vector<64x128xf32> -> vector<64x128xf32>
    %39 = vector.shape_cast %38 : vector<64x128xf32> to vector<8x8x128xf32>
    %40 = arith.truncf %39 : vector<8x8x128xf32> to vector<8x8x128xbf16>
    %c0_55 = arith.constant 0 : index
    %c0_56 = arith.constant 0 : index
    %c0_57 = arith.constant 0 : index
    %c0_58 = arith.constant 0 : index
    %41 = vector.load %arg4[%c0_55, %c0_56, %c0_57, %c0_58] : memref<1x8x8x128xbf16, #tpu.memory_space<vmem>>, vector<1x8x8x128xbf16>
    %42 = vector.shape_cast %41 : vector<1x8x8x128xbf16> to vector<8x8x128xbf16>
    %43 = vector.shape_cast %40 : vector<8x8x128xbf16> to vector<1x8x8x128xbf16>
    tpu.vector_store %arg4[%c0_55, %c0_56, %c0_57, %c0_58], %43 {strides = array<i32>} : memref<1x8x8x128xbf16, #tpu.memory_space<vmem>>, vector<1x8x8x128xbf16>,
    %cst_59 = arith.constant dense<0.000000e+00> : vector<128xf32>
    %44 = vector.multi_reduction <add>, %38, %cst_59 [0] : vector<64x128xf32> to vector<128xf32>
    %45 = vector.shape_cast %44 : vector<128xf32> to vector<1x128xf32>
    %46 = arith.mulf %38, %38 : vector<64x128xf32>
    %cst_60 = arith.constant dense<0.000000e+00> : vector<128xf32>
    %47 = vector.multi_reduction <add>, %46, %cst_60 [0] : vector<64x128xf32> to vector<128xf32>
    %48 = vector.shape_cast %47 : vector<128xf32> to vector<1x128xf32>
    %49 = tpu.concatenate %45, %48 in 0 : vector<1x128xf32>, vector<1x128xf32> -> vector<2x128xf32>
    %c0_61 = arith.constant 0 : index
    %c0_62 = arith.constant 0 : index
    %c0_63 = arith.constant 0 : index
    %50 = vector.load %arg5[%c0_61, %c0_62, %c0_63] : memref<1x2x128xf32, #tpu.memory_space<vmem>>, vector<1x2x128xf32>
    %51 = vector.shape_cast %50 : vector<1x2x128xf32> to vector<2x128xf32>
    %52 = vector.shape_cast %49 : vector<2x128xf32> to vector<1x2x128xf32>
    tpu.vector_store %arg5[%c0_61, %c0_62, %c0_63], %52 {strides = array<i32>} : memref<1x2x128xf32, #tpu.memory_space<vmem>>, vector<1x2x128xf32>,
    %c0_64 = arith.constant 0 : index
    %c512_65 = arith.constant 512 : index
    %53 = vector.load %arg8[%c0_64, %c512_65] : memref<64x1152xbf16, #tpu.memory_space<vmem>>, vector<64x128xbf16>
    %c0_66 = arith.constant 0 : index
    %c0_67 = arith.constant 0 : index
    %54 = vector.load %arg3[%c0_66, %c0_67] : memref<128x128xbf16, #tpu.memory_space<vmem>>, vector<128x128xbf16>
    %cst_68 = arith.constant dense<0.000000e+00> : vector<64x128xf32>
    %55 = tpu.matmul %53, %54, %cst_68 {dimension_numbers = #tpu.dot_dimension_numbers<[1], [0], [0], [1], [0, 0, 1, 1], [], []>} : vector<64x128xbf16>, vector<128x128xbf16>, vector<64x128xf32> -> vector<64x128xf32>
    %56 = vector.shape_cast %55 : vector<64x128xf32> to vector<8x8x128xf32>
    %57 = arith.truncf %56 : vector<8x8x128xf32> to vector<8x8x128xbf16>
    %c0_69 = arith.constant 0 : index
    %c0_70 = arith.constant 0 : index
    %c0_71 = arith.constant 0 : index
    %c0_72 = arith.constant 0 : index
    %58 = vector.load %arg6[%c0_69, %c0_70, %c0_71, %c0_72] : memref<1x8x8x128xbf16, #tpu.memory_space<vmem>>, vector<1x8x8x128xbf16>
    %59 = vector.shape_cast %58 : vector<1x8x8x128xbf16> to vector<8x8x128xbf16>
    %60 = vector.shape_cast %57 : vector<8x8x128xbf16> to vector<1x8x8x128xbf16>
    tpu.vector_store %arg6[%c0_69, %c0_70, %c0_71, %c0_72], %60 {strides = array<i32>} : memref<1x8x8x128xbf16, #tpu.memory_space<vmem>>, vector<1x8x8x128xbf16>,
    %cst_73 = arith.constant dense<0.000000e+00> : vector<128xf32>
    %61 = vector.multi_reduction <add>, %55, %cst_73 [0] : vector<64x128xf32> to vector<128xf32>
    %62 = vector.shape_cast %61 : vector<128xf32> to vector<1x128xf32>
    %63 = arith.mulf %55, %55 : vector<64x128xf32>
    %cst_74 = arith.constant dense<0.000000e+00> : vector<128xf32>
    %64 = vector.multi_reduction <add>, %63, %cst_74 [0] : vector<64x128xf32> to vector<128xf32>
    %65 = vector.shape_cast %64 : vector<128xf32> to vector<1x128xf32>
    %66 = tpu.concatenate %62, %65 in 0 : vector<1x128xf32>, vector<1x128xf32> -> vector<2x128xf32>
    %c0_75 = arith.constant 0 : index
    %c0_76 = arith.constant 0 : index
    %c0_77 = arith.constant 0 : index
    %67 = vector.load %arg7[%c0_75, %c0_76, %c0_77] : memref<1x2x128xf32, #tpu.memory_space<vmem>>, vector<1x2x128xf32>
    %68 = vector.shape_cast %67 : vector<1x2x128xf32> to vector<2x128xf32>
    %69 = vector.shape_cast %66 : vector<2x128xf32> to vector<1x2x128xf32>
    tpu.vector_store %arg7[%c0_75, %c0_76, %c0_77], %69 {strides = array<i32>} : memref<1x2x128xf32, #tpu.memory_space<vmem>>, vector<1x2x128xf32>,
    return
  }
  func.func @transform_0(%arg0: i32) -> (i32, i32, i32, i32, i32) {
    %c0_i32 = arith.constant 0 : i32
    %c0_i32_0 = arith.constant 0 : i32
    %c0_i32_1 = arith.constant 0 : i32
    %c0_i32_2 = arith.constant 0 : i32
    %c0_i32_3 = arith.constant 0 : i32
    return %c0_i32, %arg0, %c0_i32_0, %c0_i32_1, %c0_i32_2 : i32, i32, i32, i32, i32
  }
  func.func @transform_1(%arg0: i32) -> (i32, i32) {
    %c0_i32 = arith.constant 0 : i32
    %c0_i32_0 = arith.constant 0 : i32
    %c0_i32_1 = arith.constant 0 : i32
    return %c0_i32, %c0_i32_0 : i32, i32
  }
  func.func @transform_2(%arg0: i32) -> (i32, i32) {
    %c0_i32 = arith.constant 0 : i32
    %c0_i32_0 = arith.constant 0 : i32
    %c0_i32_1 = arith.constant 0 : i32
    return %c0_i32, %c0_i32_0 : i32, i32
  }
  func.func @transform_3(%arg0: i32) -> (i32, i32, i32, i32) {
    %c0_i32 = arith.constant 0 : i32
    %c0_i32_0 = arith.constant 0 : i32
    %c0_i32_1 = arith.constant 0 : i32
    %c0_i32_2 = arith.constant 0 : i32
    return %arg0, %c0_i32, %c0_i32_0, %c0_i32_1 : i32, i32, i32, i32
  }
  func.func @transform_4(%arg0: i32) -> (i32, i32, i32) {
    %c0_i32 = arith.constant 0 : i32
    %c0_i32_0 = arith.constant 0 : i32
    %c0_i32_1 = arith.constant 0 : i32
    return %arg0, %c0_i32, %c0_i32_0 : i32, i32, i32
  }
  func.func @transform_5(%arg0: i32) -> (i32, i32, i32, i32) {
    %c0_i32 = arith.constant 0 : i32
    %c0_i32_0 = arith.constant 0 : i32
    %c0_i32_1 = arith.constant 0 : i32
    %c0_i32_2 = arith.constant 0 : i32
    return %arg0, %c0_i32, %c0_i32_0, %c0_i32_1 : i32, i32, i32, i32
  }
  func.func @transform_6(%arg0: i32) -> (i32, i32, i32) {
    %c0_i32 = arith.constant 0 : i32
    %c0_i32_0 = arith.constant 0 : i32
    %c0_i32_1 = arith.constant 0 : i32
    return %arg0, %c0_i32, %c0_i32_0 : i32, i32, i32
  }
}

</mosaic_0001>

<llo_original>
// kernel: tpu_custom_call.1
$region0: #{tpu_custom_call.1}
  #allocation0 [shape = 'u32[]', space=smem, size = 0x4, offset = 0x4, fixed_abs, tag = 'smem constant byte address 0x4 - core index']
  #allocation1 [shape = 'u32[144,128]{1,0:T(1,128)}', space=vmem, size = 0x12000, scoped, tag = 'internal scratch']
  #allocation2 [shape = 'bf16[64,1152]{1,0:T(16,128)(2,1)}', space=vmem, size = 0x24000, scoped, tag = 'scratch operand']
  %s0 = inlined_call_operand.vmem [shape: bf16[4,2,9,9,128], index: 0, kind: input, shape index: {}]
  %s1 = inlined_call_operand.vmem [shape: bf16[1152,128], index: 1, kind: input, shape index: {}]
  %s2 = inlined_call_operand.vmem [shape: bf16[128,128], index: 2, kind: input, shape index: {}]
  %s3 = inlined_call_operand.hbm [shape: bf16[2,8,8,128], index: 3, kind: output, shape index: {0}]
  %s4 = inlined_call_operand.hbm [shape: f32[2,2,128], index: 4, kind: output, shape index: {1}]
  %s5 = inlined_call_operand.hbm [shape: bf16[2,8,8,128], index: 5, kind: output, shape index: {2}]
  %s6 = inlined_call_operand.hbm [shape: f32[2,2,128], index: 6, kind: output, shape index: {3}]
  %7 = xla_tuple %s3, %s4, %s5, %s6
  %s8 = sld [smem:[#allocation0]]
  $region110: #{tpu_custom_call.1} parent=0
    _
  %s10 = ssub.s32 1, %s8
  %s11 = scalar_select 0, %s10, %s8
  $region1: #{tpu_custom_call.1} parent=0
    #allocation3 [shape = 'u8[294912]{0}', space=vmem, size = 0x48000, scoped, tag = 'input window, operand 0']
    #allocation4 [shape = 'u8[32768]{0}', space=vmem, size = 0x8000, scoped, tag = 'output window, operand 0']
    #allocation5 [shape = 's32[2]{0}', space=sflag, size = 0x8, scoped, tag = 'scoped memory for tpu_custom_call.1']
    #allocation6 [shape = 'u8[2048]{0}', space=vmem, size = 0x800, scoped, tag = 'output window, operand 1']
    #allocation7 [shape = 's32[2]{0}', space=sflag, size = 0x8, scoped, tag = 'scoped memory for tpu_custom_call.1']
    #allocation8 [shape = 'u8[32768]{0}', space=vmem, size = 0x8000, scoped, tag = 'output window, operand 2']
    #allocation9 [shape = 'u8[2048]{0}', space=vmem, size = 0x800, scoped, tag = 'output window, operand 3']
    #allocation10 [shape = 's32[2]{0}', space=sflag, size = 0x8, scoped, tag = 'scoped memory for tpu_custom_call.1']
    %12 = vsyncpa [#allocation5], 0
    %s13 = scalar_lea.sflag [#allocation5], 1
    %14 = vsyncpa %s13, 0
    %15 = vsyncpa [#allocation7], 0
    %s16 = scalar_lea.sflag [#allocation7], 1
    %17 = vsyncpa %s16, 0
    %18 = vsyncpa [#allocation10], 0
    %s19 = scalar_lea.sflag [#allocation10], 1
    %20 = vsyncpa %s19, 0
    loop: start=0, step=1, limit=4
    $region2: #{tpu_custom_call.1} parent=1 // loop_pre_header
      _
    $region3: #{tpu_custom_call.1} parent=1 // loop_header
      %s22 = sphi 0, %s26
      %p23 = scmp.ge.s32.totalorder %s22, 4
      %s32 = sphi 0, %s34
      %s35 = sphi 0, %s32
      %s36 = sphi 0, %s35
      %s52 = sphi 0, %s36
      %s56 = sphi 0, %s56
      %s58 = sphi 0, %s56
      %s59 = sphi 0, %s58
      %s73 = sphi 0, %s59
      %s77 = sphi 0, %s77
      %s79 = sphi 0, %s77
      %s80 = sphi 0, %s79
      %s94 = sphi 0, %s80
      %s100 = sphi 0, %s102
      %s103 = sphi 0, %s100
      %s104 = sphi 0, %s103
      %s120 = sphi 0, %s104
      %s126 = sphi 0, %s128
      %s129 = sphi 0, %s126
      %s130 = sphi 0, %s129
      %s146 = sphi 0, %s130
      %s152 = sphi 0, %s154
      %s155 = sphi 0, %s152
      %s156 = sphi 0, %s155
      %s172 = sphi 0, %s156
      %s178 = sphi 0, %s180
      %s181 = sphi 0, %s178
      %s182 = sphi 0, %s181
      %s198 = sphi 0, %s182
    $region4: #{tpu_custom_call.1} parent=1 // loop_header_branch
      %25 = sbr.rel (%p23) target = $region8
    $region5: #{tpu_custom_call.1} parent=1 // loop_body
      %s27 = ssub.s32 %s22, 1
      %s28 = ssub.s32 %s22, 2
      %s29 = sadd.s32 %s22, 1
      %s30 = ssub.s32 %s22, %s29
      %p31 = scmp.eq.s32.totalorder %s30, 0
      %s33 = sadd.s32 %s32, 1
      %s34 = scalar_select %p31, %s32, %s33
      %p37 = pneg %p31
      %p38 = scmp.eq.s32.totalorder %s22, 1
      %p39 = por %p37, %p38
      %p40 = scmp.ne.s32.totalorder %s32, %s35
      %p41 = scmp.eq.s32.totalorder %s22, 0
      %p42 = por %p40, %p41
      %p43 = scmp.ne.s32.totalorder %s32, %s35
      %p44 = scmp.eq.s32.totalorder %s27, 1
      %p45 = por %p43, %p44
      %p46 = scmp.ne.s32.totalorder %s35, %s36
      %p47 = scmp.eq.s32.totalorder %s27, 0
      %p48 = por %p46, %p47
      %p49 = scmp.ne.s32.totalorder %s35, %s36
      %p50 = scmp.eq.s32.totalorder %s28, 1
      %p51 = por %p49, %p50
      %p53 = scmp.ne.s32.totalorder %s36, %s52
      %p54 = scmp.eq.s32.totalorder %s28, 0
      %p55 = por %p53, %p54
      %s57 = sadd.s32 %s56, 1
      %p60 = scmp.eq.s32.totalorder %s22, 1
      %p61 = scmp.ne.s32.totalorder %s56, %s58
      %p62 = scmp.eq.s32.totalorder %s22, 0
      %p63 = por %p61, %p62
      %p64 = scmp.ne.s32.totalorder %s56, %s58
      %p65 = scmp.eq.s32.totalorder %s27, 1
      %p66 = por %p64, %p65
      %p67 = scmp.ne.s32.totalorder %s58, %s59
      %p68 = scmp.eq.s32.totalorder %s27, 0
      %p69 = por %p67, %p68
      %p70 = scmp.ne.s32.totalorder %s58, %s59
      %p71 = scmp.eq.s32.totalorder %s28, 1
      %p72 = por %p70, %p71
      %p74 = scmp.ne.s32.totalorder %s59, %s73
      %p75 = scmp.eq.s32.totalorder %s28, 0
      %p76 = por %p74, %p75
      %s78 = sadd.s32 %s77, 1
      %p81 = scmp.eq.s32.totalorder %s22, 1
      %p82 = scmp.ne.s32.totalorder %s77, %s79
      %p83 = scmp.eq.s32.totalorder %s22, 0
      %p84 = por %p82, %p83
      %p85 = scmp.ne.s32.totalorder %s77, %s79
      %p86 = scmp.eq.s32.totalorder %s27, 1
      %p87 = por %p85, %p86
      %p88 = scmp.ne.s32.totalorder %s79, %s80
      %p89 = scmp.eq.s32.totalorder %s27, 0
      %p90 = por %p88, %p89
      %p91 = scmp.ne.s32.totalorder %s79, %s80
      %p92 = scmp.eq.s32.totalorder %s28, 1
      %p93 = por %p91, %p92
      %p95 = scmp.ne.s32.totalorder %s80, %s94
      %p96 = scmp.eq.s32.totalorder %s28, 0
      %p97 = por %p95, %p96
      %s98 = ssub.s32 %s22, %s29
      %p99 = scmp.eq.s32.totalorder %s98, 0
      %s101 = sadd.s32 %s100, 1
      %s102 = scalar_select %p99, %s100, %s101
      %p105 = pneg %p99
      %p106 = scmp.eq.s32.totalorder %s22, 1
      %p107 = por %p105, %p106
      %p108 = scmp.ne.s32.totalorder %s100, %s103
      %p109 = scmp.eq.s32.totalorder %s22, 0
      %p110 = por %p108, %p109
      %p111 = scmp.ne.s32.totalorder %s100, %s103
      %p112 = scmp.eq.s32.totalorder %s27, 1
      %p113 = por %p111, %p112
      %p114 = scmp.ne.s32.totalorder %s103, %s104
      %p115 = scmp.eq.s32.totalorder %s27, 0
      %p116 = por %p114, %p115
      %p117 = scmp.ne.s32.totalorder %s103, %s104
      %p118 = scmp.eq.s32.totalorder %s28, 1
      %p119 = por %p117, %p118
      %p121 = scmp.ne.s32.totalorder %s104, %s120
      %p122 = scmp.eq.s32.totalorder %s28, 0
      %p123 = por %p121, %p122
      %s124 = ssub.s32 %s22, %s29
      %p125 = scmp.eq.s32.totalorder %s124, 0
      %s127 = sadd.s32 %s126, 1
      %s128 = scalar_select %p125, %s126, %s127
      %p131 = pneg %p125
      %p132 = scmp.eq.s32.totalorder %s22, 1
      %p133 = por %p131, %p132
      %p134 = scmp.ne.s32.totalorder %s126, %s129
      %p135 = scmp.eq.s32.totalorder %s22, 0
      %p136 = por %p134, %p135
      %p137 = scmp.ne.s32.totalorder %s126, %s129
      %p138 = scmp.eq.s32.totalorder %s27, 1
      %p139 = por %p137, %p138
      %p140 = scmp.ne.s32.totalorder %s129, %s130
      %p141 = scmp.eq.s32.totalorder %s27, 0
      %p142 = por %p140, %p141
      %p143 = scmp.ne.s32.totalorder %s129, %s130
      %p144 = scmp.eq.s32.totalorder %s28, 1
      %p145 = por %p143, %p144
      %p147 = scmp.ne.s32.totalorder %s130, %s146
      %p148 = scmp.eq.s32.totalorder %s28, 0
      %p149 = por %p147, %p148
      %s150 = ssub.s32 %s22, %s29
      %p151 = scmp.eq.s32.totalorder %s150, 0
      %s153 = sadd.s32 %s152, 1
      %s154 = scalar_select %p151, %s152, %s153
      %p157 = pneg %p151
      %p158 = scmp.eq.s32.totalorder %s22, 1
      %p159 = por %p157, %p158
      %p160 = scmp.ne.s32.totalorder %s152, %s155
      %p161 = scmp.eq.s32.totalorder %s22, 0
      %p162 = por %p160, %p161
      %p163 = scmp.ne.s32.totalorder %s152, %s155
      %p164 = scmp.eq.s32.totalorder %s27, 1
      %p165 = por %p163, %p164
      %p166 = scmp.ne.s32.totalorder %s155, %s156
      %p167 = scmp.eq.s32.totalorder %s27, 0
      %p168 = por %p166, %p167
      %p169 = scmp.ne.s32.totalorder %s155, %s156
      %p170 = scmp.eq.s32.totalorder %s28, 1
      %p171 = por %p169, %p170
      %p173 = scmp.ne.s32.totalorder %s156, %s172
      %p174 = scmp.eq.s32.totalorder %s28, 0
      %p175 = por %p173, %p174
      %s176 = ssub.s32 %s22, %s29
      %p177 = scmp.eq.s32.totalorder %s176, 0
      %s179 = sadd.s32 %s178, 1
      %s180 = scalar_select %p177, %s178, %s179
      %p183 = pneg %p177
      %p184 = scmp.eq.s32.totalorder %s22, 1
      %p185 = por %p183, %p184
      %p186 = scmp.ne.s32.totalorder %s178, %s181
      %p187 = scmp.eq.s32.totalorder %s22, 0
      %p188 = por %p186, %p187
      %p189 = scmp.ne.s32.totalorder %s178, %s181
      %p190 = scmp.eq.s32.totalorder %s27, 1
      %p191 = por %p189, %p190
      %p192 = scmp.ne.s32.totalorder %s181, %s182
      %p193 = scmp.eq.s32.totalorder %s27, 0
      %p194 = por %p192, %p193
      %p195 = scmp.ne.s32.totalorder %s181, %s182
      %p196 = scmp.eq.s32.totalorder %s28, 1
      %p197 = por %p195, %p196
      %p199 = scmp.ne.s32.totalorder %s182, %s198
      %p200 = scmp.eq.s32.totalorder %s28, 0
      %p201 = por %p199, %p200
      %p202 = scmp.le.s32.totalorder 1, %s22
      %p203 = scmp.lt.s32.totalorder %s22, 3
      %p204 = pnand %p202, %p203
      %p205 = pneg %p204
      // Predicated region
      $region9: #{tpu_custom_call.1} parent=5 // pred_check
        _
      $region10: #{tpu_custom_call.1} parent=5 // pred_check_branch
        %207 = sbr.rel (%p204) target = $region12
      $region11: #{tpu_custom_call.1} parent=5 // pred_region
        %s208 = ssub.s32 %s22, 1
        // Predicated region
        $region13: #{tpu_custom_call.1} parent=11 // pred_check
          %p209 = pneg %p69
        $region14: #{tpu_custom_call.1} parent=11 // pred_check_branch
          %211 = sbr.rel (%p209) target = $region16
        $region15: #{tpu_custom_call.1} parent=11 // pred_region
          _
        $region16: #{tpu_custom_call.1} parent=11 // pred_fallthru
          _
        // Predicated region
        $region17: #{tpu_custom_call.1} parent=11 // pred_check
          %p212 = pneg %p90
        $region18: #{tpu_custom_call.1} parent=11 // pred_check_branch
          %214 = sbr.rel (%p212) target = $region20
        $region19: #{tpu_custom_call.1} parent=11 // pred_region
          _
        $region20: #{tpu_custom_call.1} parent=11 // pred_fallthru
          _
      $region12: #{tpu_custom_call.1} parent=5 // pred_fallthru
        _
      %p215 = scmp.lt.s32.totalorder %s22, 2
      // Predicated region
      $region21: #{tpu_custom_call.1} parent=5 // pred_check
        %p216 = pneg %p215
      $region22: #{tpu_custom_call.1} parent=5 // pred_check_branch
        %218 = sbr.rel (%p216) target = $region24
      $region23: #{tpu_custom_call.1} parent=5 // pred_region
        // Predicated region
        $region25: #{tpu_custom_call.1} parent=23 // pred_check
          %p219 = pneg %p42
        $region26: #{tpu_custom_call.1} parent=23 // pred_check_branch
          %221 = sbr.rel (%p219) target = $region28
        $region27: #{tpu_custom_call.1} parent=23 // pred_region
          %s222 = sand.u32 %s32, 1
          %s223 = sand.u32 %s32, 1
          %s224 = smul.addr %s223, 288
          %s225 = scalar_lea.vmem [#allocation3], %s224
          %s226 = smul.addr %s22, 18
          %s227 = smul.addr %s226, 4
          %s228 = scalar_lea.vmem %s0, %s227
          // Predicated region
          $region29: #{tpu_custom_call.1} parent=27 // pred_check
            _
          $region30: #{tpu_custom_call.1} parent=27 // pred_check_branch
            %230 = sbr.rel (0) target = $region32
          $region31: #{tpu_custom_call.1} parent=27 // pred_region
            // Predicated region
            $region33: #{tpu_custom_call.1} parent=31 // pred_check
              _
            $region34: #{tpu_custom_call.1} parent=31 // pred_check_branch
              %232 = sbr.rel target = $region36
            $region35: #{tpu_custom_call.1} parent=31 // pred_region
              // Predicated region
              $region48: #{tpu_custom_call.1} parent=35 // pred_check
                _
              $region49: #{tpu_custom_call.1} parent=35 // pred_check_branch
                %389 = sbr.rel (0) target = $region51
              $region50: #{tpu_custom_call.1} parent=35 // pred_region
                loop: start=0, step=1, limit=1
                $region52: #{tpu_custom_call.1} parent=50 // loop_pre_header
                  _
                $region53: #{tpu_custom_call.1} parent=50 // loop_header
                  %s391 = sphi 0, %s395
                  %p392 = scmp.ge.s32.totalorder %s391, 1
                  %s396 = sphi %s228, %s228
                  %s397 = sphi %s225, %s225
                $region54: #{tpu_custom_call.1} parent=50 // loop_header_branch
                  %394 = sbr.rel (%p392) target = $region58
                $region55: #{tpu_custom_call.1} parent=50 // loop_body
                  _
                $region56: #{tpu_custom_call.1} parent=50 // loop_footer
                  %s395 = sadd.s32 1, %s391
                $region57: #{tpu_custom_call.1} parent=50 // loop_footer_branch
                  %390 = sbr.rel target = $region53
                $region58: #{tpu_custom_call.1} parent=50 // loop_exit
                  _
                loop: start=0, step=1, limit=1
                $region59: #{tpu_custom_call.1} parent=50 // loop_pre_header
                  _
                $region60: #{tpu_custom_call.1} parent=50 // loop_header
                  %s400 = sphi 0, %s404
                  %p401 = scmp.ge.s32.totalorder %s400, 1
                  %s405 = sphi %s228, %s228
                  %s406 = sphi %s225, %s225
                $region61: #{tpu_custom_call.1} parent=50 // loop_header_branch
                  %403 = sbr.rel (%p401) target = $region65
                $region62: #{tpu_custom_call.1} parent=50 // loop_body
                  %v407 = vld [vmem:[%s405] sm:$0xf]
                  %408 = vst [vmem:[%s406] sm:$0xf] %v407
                  %v409 = vld [vmem:[%s405 + $0x4] sm:$0xf]
                  %410 = vst [vmem:[%s406 + $0x4] sm:$0xf] %v409
                  %v411 = vld [vmem:[%s405 + $0x8] sm:$0xf]
                  %412 = vst [vmem:[%s406 + $0x8] sm:$0xf] %v411
                  %v413 = vld [vmem:[%s405 + $0xc] sm:$0xf]
                  %414 = vst [vmem:[%s406 + $0xc] sm:$0xf] %v413
                  %v415 = vld [vmem:[%s405 + $0x10] sm:$0xf]
                  %416 = vst [vmem:[%s406 + $0x10] sm:$0xf] %v415
                  %v417 = vld [vmem:[%s405 + $0x14] sm:$0xf]
                  %418 = vst [vmem:[%s406 + $0x14] sm:$0xf] %v417
                  %v419 = vld [vmem:[%s405 + $0x18] sm:$0xf]
                  %420 = vst [vmem:[%s406 + $0x18] sm:$0xf] %v419
                  %v421 = vld [vmem:[%s405 + $0x1c] sm:$0xf]
                  %422 = vst [vmem:[%s406 + $0x1c] sm:$0xf] %v421
                  %v423 = vld [vmem:[%s405 + $0x20] sm:$0xf]
                  %424 = vst [vmem:[%s406 + $0x20] sm:$0xf] %v423
                  %v425 = vld [vmem:[%s405 + $0x24] sm:$0xf]
                  %426 = vst [vmem:[%s406 + $0x24] sm:$0xf] %v425
                  %v427 = vld [vmem:[%s405 + $0x28] sm:$0xf]
                  %428 = vst [vmem:[%s406 + $0x28] sm:$0xf] %v427
                  %v429 = vld [vmem:[%s405 + $0x2c] sm:$0xf]
                  %430 = vst [vmem:[%s406 + $0x2c] sm:$0xf] %v429
                  %v431 = vld [vmem:[%s405 + $0x30] sm:$0xf]
                  %432 = vst [vmem:[%s406 + $0x30] sm:$0xf] %v431
                  %v433 = vld [vmem:[%s405 + $0x34] sm:$0xf]
                  %434 = vst [vmem:[%s406 + $0x34] sm:$0xf] %v433
                  %v435 = vld [vmem:[%s405 + $0x38] sm:$0xf]
                  %436 = vst [vmem:[%s406 + $0x38] sm:$0xf] %v435
                  %v437 = vld [vmem:[%s405 + $0x3c] sm:$0xf]
                  %438 = vst [vmem:[%s406 + $0x3c] sm:$0xf] %v437
                  %v439 = vld [vmem:[%s405 + $0x40] sm:$0xf]
                  %440 = vst [vmem:[%s406 + $0x40] sm:$0xf] %v439
                  %v441 = vld [vmem:[%s405 + $0x44] sm:$0xf]
                  %442 = vst [vmem:[%s406 + $0x44] sm:$0xf] %v441
                  %v443 = vld [vmem:[%s405 + $0x90] sm:$0xf]
                  %444 = vst [vmem:[%s406 + $0x48] sm:$0xf] %v443
                  %v445 = vld [vmem:[%s405 + $0x94] sm:$0xf]
                  %446 = vst [vmem:[%s406 + $0x4c] sm:$0xf] %v445
                  %v447 = vld [vmem:[%s405 + $0x98] sm:$0xf]
                  %448 = vst [vmem:[%s406 + $0x50] sm:$0xf] %v447
                  %v449 = vld [vmem:[%s405 + $0x9c] sm:$0xf]
                  %450 = vst [vmem:[%s406 + $0x54] sm:$0xf] %v449
                  %v451 = vld [vmem:[%s405 + $0xa0] sm:$0xf]
                  %452 = vst [vmem:[%s406 + $0x58] sm:$0xf] %v451
                  %v453 = vld [vmem:[%s405 + $0xa4] sm:$0xf]
                  %454 = vst [vmem:[%s406 + $0x5c] sm:$0xf] %v453
                  %v455 = vld [vmem:[%s405 + $0xa8] sm:$0xf]
                  %456 = vst [vmem:[%s406 + $0x60] sm:$0xf] %v455
                  %v457 = vld [vmem:[%s405 + $0xac] sm:$0xf]
                  %458 = vst [vmem:[%s406 + $0x64] sm:$0xf] %v457
                  %v459 = vld [vmem:[%s405 + $0xb0] sm:$0xf]
                  %460 = vst [vmem:[%s406 + $0x68] sm:$0xf] %v459
                  %v461 = vld [vmem:[%s405 + $0xb4] sm:$0xf]
                  %462 = vst [vmem:[%s406 + $0x6c] sm:$0xf] %v461
                  %v463 = vld [vmem:[%s405 + $0xb8] sm:$0xf]
                  %464 = vst [vmem:[%s406 + $0x70] sm:$0xf] %v463
                  %v465 = vld [vmem:[%s405 + $0xbc] sm:$0xf]
                  %466 = vst [vmem:[%s406 + $0x74] sm:$0xf] %v465
                  %v467 = vld [vmem:[%s405 + $0xc0] sm:$0xf]
                  %468 = vst [vmem:[%s406 + $0x78] sm:$0xf] %v467
                  %v469 = vld [vmem:[%s405 + $0xc4] sm:$0xf]
                  %470 = vst [vmem:[%s406 + $0x7c] sm:$0xf] %v469
                  %v471 = vld [vmem:[%s405 + $0xc8] sm:$0xf]
                  %472 = vst [vmem:[%s406 + $0x80] sm:$0xf] %v471
                  %v473 = vld [vmem:[%s405 + $0xcc] sm:$0xf]
                  %474 = vst [vmem:[%s406 + $0x84] sm:$0xf] %v473
                  %v475 = vld [vmem:[%s405 + $0xd0] sm:$0xf]
                  %476 = vst [vmem:[%s406 + $0x88] sm:$0xf] %v475
                  %v477 = vld [vmem:[%s405 + $0xd4] sm:$0xf]
                  %478 = vst [vmem:[%s406 + $0x8c] sm:$0xf] %v477
                  %v479 = vld [vmem:[%s405 + $0x120] sm:$0xf]
                  %480 = vst [vmem:[%s406 + $0x90] sm:$0xf] %v479
                  %v481 = vld [vmem:[%s405 + $0x124] sm:$0xf]
                  %482 = vst [vmem:[%s406 + $0x94] sm:$0xf] %v481
                  %v483 = vld [vmem:[%s405 + $0x128] sm:$0xf]
                  %484 = vst [vmem:[%s406 + $0x98] sm:$0xf] %v483
                  %v485 = vld [vmem:[%s405 + $0x12c] sm:$0xf]
                  %486 = vst [vmem:[%s406 + $0x9c] sm:$0xf] %v485
                  %v487 = vld [vmem:[%s405 + $0x130] sm:$0xf]
                  %488 = vst [vmem:[%s406 + $0xa0] sm:$0xf] %v487
                  %v489 = vld [vmem:[%s405 + $0x134] sm:$0xf]
                  %490 = vst [vmem:[%s406 + $0xa4] sm:$0xf] %v489
                  %v491 = vld [vmem:[%s405 + $0x138] sm:$0xf]
                  %492 = vst [vmem:[%s406 + $0xa8] sm:$0xf] %v491
                  %v493 = vld [vmem:[%s405 + $0x13c] sm:$0xf]
                  %494 = vst [vmem:[%s406 + $0xac] sm:$0xf] %v493
                  %v495 = vld [vmem:[%s405 + $0x140] sm:$0xf]
                  %496 = vst [vmem:[%s406 + $0xb0] sm:$0xf] %v495
                  %v497 = vld [vmem:[%s405 + $0x144] sm:$0xf]
                  %498 = vst [vmem:[%s406 + $0xb4] sm:$0xf] %v497
                  %v499 = vld [vmem:[%s405 + $0x148] sm:$0xf]
                  %500 = vst [vmem:[%s406 + $0xb8] sm:$0xf] %v499
                  %v501 = vld [vmem:[%s405 + $0x14c] sm:$0xf]
                  %502 = vst [vmem:[%s406 + $0xbc] sm:$0xf] %v501
                  %v503 = vld [vmem:[%s405 + $0x150] sm:$0xf]
                  %504 = vst [vmem:[%s406 + $0xc0] sm:$0xf] %v503
                  %v505 = vld [vmem:[%s405 + $0x154] sm:$0xf]
                  %506 = vst [vmem:[%s406 + $0xc4] sm:$0xf] %v505
                  %v507 = vld [vmem:[%s405 + $0x158] sm:$0xf]
                  %508 = vst [vmem:[%s406 + $0xc8] sm:$0xf] %v507
                  %v509 = vld [vmem:[%s405 + $0x15c] sm:$0xf]
                  %510 = vst [vmem:[%s406 + $0xcc] sm:$0xf] %v509
                  %v511 = vld [vmem:[%s405 + $0x160] sm:$0xf]
                  %512 = vst [vmem:[%s406 + $0xd0] sm:$0xf] %v511
                  %v513 = vld [vmem:[%s405 + $0x164] sm:$0xf]
                  %514 = vst [vmem:[%s406 + $0xd4] sm:$0xf] %v513
                  %v515 = vld [vmem:[%s405 + $0x1b0] sm:$0xf]
                  %516 = vst [vmem:[%s406 + $0xd8] sm:$0xf] %v515
                  %v517 = vld [vmem:[%s405 + $0x1b4] sm:$0xf]
                  %518 = vst [vmem:[%s406 + $0xdc] sm:$0xf] %v517
                  %v519 = vld [vmem:[%s405 + $0x1b8] sm:$0xf]
                  %520 = vst [vmem:[%s406 + $0xe0] sm:$0xf] %v519
                  %v521 = vld [vmem:[%s405 + $0x1bc] sm:$0xf]
                  %522 = vst [vmem:[%s406 + $0xe4] sm:$0xf] %v521
                  %v523 = vld [vmem:[%s405 + $0x1c0] sm:$0xf]
                  %524 = vst [vmem:[%s406 + $0xe8] sm:$0xf] %v523
                  %v525 = vld [vmem:[%s405 + $0x1c4] sm:$0xf]
                  %526 = vst [vmem:[%s406 + $0xec] sm:$0xf] %v525
                  %v527 = vld [vmem:[%s405 + $0x1c8] sm:$0xf]
                  %528 = vst [vmem:[%s406 + $0xf0] sm:$0xf] %v527
                  %v529 = vld [vmem:[%s405 + $0x1cc] sm:$0xf]
                  %530 = vst [vmem:[%s406 + $0xf4] sm:$0xf] %v529
                  %v531 = vld [vmem:[%s405 + $0x1d0] sm:$0xf]
                  %532 = vst [vmem:[%s406 + $0xf8] sm:$0xf] %v531
                  %v533 = vld [vmem:[%s405 + $0x1d4] sm:$0xf]
                  %534 = vst [vmem:[%s406 + $0xfc] sm:$0xf] %v533
                  %v535 = vld [vmem:[%s405 + $0x1d8] sm:$0xf]
                  %536 = vst [vmem:[%s406 + $0x100] sm:$0xf] %v535
                  %v537 = vld [vmem:[%s405 + $0x1dc] sm:$0xf]
                  %538 = vst [vmem:[%s406 + $0x104] sm:$0xf] %v537
                  %v539 = vld [vmem:[%s405 + $0x1e0] sm:$0xf]
                  %540 = vst [vmem:[%s406 + $0x108] sm:$0xf] %v539
                  %v541 = vld [vmem:[%s405 + $0x1e4] sm:$0xf]
                  %542 = vst [vmem:[%s406 + $0x10c] sm:$0xf] %v541
                  %v543 = vld [vmem:[%s405 + $0x1e8] sm:$0xf]
                  %544 = vst [vmem:[%s406 + $0x110] sm:$0xf] %v543
                  %v545 = vld [vmem:[%s405 + $0x1ec] sm:$0xf]
                  %546 = vst [vmem:[%s406 + $0x114] sm:$0xf] %v545
                  %v547 = vld [vmem:[%s405 + $0x1f0] sm:$0xf]
                  %548 = vst [vmem:[%s406 + $0x118] sm:$0xf] %v547
                  %v549 = vld [vmem:[%s405 + $0x1f4] sm:$0xf]
                  %550 = vst [vmem:[%s406 + $0x11c] sm:$0xf] %v549
                $region63: #{tpu_custom_call.1} parent=50 // loop_footer
                  %s404 = sadd.s32 1, %s400
                $region64: #{tpu_custom_call.1} parent=50 // loop_footer_branch
                  %399 = sbr.rel target = $region60
                $region65: #{tpu_custom_call.1} parent=50 // loop_exit
                  _
              $region51: #{tpu_custom_call.1} parent=35 // pred_fallthru
                _
            $region36: #{tpu_custom_call.1} parent=31 // pred_fallthru
              _
            // Predicated region
            $region37: #{tpu_custom_call.1} parent=31 // pred_check
              _
            $region38: #{tpu_custom_call.1} parent=31 // pred_check_branch
              %234 = sbr.rel (0) target = $region40
            $region39: #{tpu_custom_call.1} parent=31 // pred_region
              loop: start=0, step=1, limit=1
              $region41: #{tpu_custom_call.1} parent=39 // loop_pre_header
                _
              $region42: #{tpu_custom_call.1} parent=39 // loop_header
                %s237 = sphi 0, %s241
                %p238 = scmp.ge.s32.totalorder %s237, 1
                %s242 = sphi %s228, %s228
                %s243 = sphi %s225, %s225
              $region43: #{tpu_custom_call.1} parent=39 // loop_header_branch
                %240 = sbr.rel (%p238) target = $region47
              $region44: #{tpu_custom_call.1} parent=39 // loop_body
                %v244 = vld [vmem:[%s242] sm:$0xf]
                %245 = vst [vmem:[%s243] sm:$0xf] %v244
                %v246 = vld [vmem:[%s242 + $0x4] sm:$0xf]
                %247 = vst [vmem:[%s243 + $0x4] sm:$0xf] %v246
                %v248 = vld [vmem:[%s242 + $0x8] sm:$0xf]
                %249 = vst [vmem:[%s243 + $0x8] sm:$0xf] %v248
                %v250 = vld [vmem:[%s242 + $0xc] sm:$0xf]
                %251 = vst [vmem:[%s243 + $0xc] sm:$0xf] %v250
                %v252 = vld [vmem:[%s242 + $0x10] sm:$0xf]
                %253 = vst [vmem:[%s243 + $0x10] sm:$0xf] %v252
                %v254 = vld [vmem:[%s242 + $0x14] sm:$0xf]
                %255 = vst [vmem:[%s243 + $0x14] sm:$0xf] %v254
                %v256 = vld [vmem:[%s242 + $0x18] sm:$0xf]
                %257 = vst [vmem:[%s243 + $0x18] sm:$0xf] %v256
                %v258 = vld [vmem:[%s242 + $0x1c] sm:$0xf]
                %259 = vst [vmem:[%s243 + $0x1c] sm:$0xf] %v258
                %v260 = vld [vmem:[%s242 + $0x20] sm:$0xf]
                %261 = vst [vmem:[%s243 + $0x20] sm:$0xf] %v260
                %v262 = vld [vmem:[%s242 + $0x24] sm:$0xf]
                %263 = vst [vmem:[%s243 + $0x24] sm:$0xf] %v262
                %v264 = vld [vmem:[%s242 + $0x28] sm:$0xf]
                %265 = vst [vmem:[%s243 + $0x28] sm:$0xf] %v264
                %v266 = vld [vmem:[%s242 + $0x2c] sm:$0xf]
                %267 = vst [vmem:[%s243 + $0x2c] sm:$0xf] %v266
                %v268 = vld [vmem:[%s242 + $0x30] sm:$0xf]
                %269 = vst [vmem:[%s243 + $0x30] sm:$0xf] %v268
                %v270 = vld [vmem:[%s242 + $0x34] sm:$0xf]
                %271 = vst [vmem:[%s243 + $0x34] sm:$0xf] %v270
                %v272 = vld [vmem:[%s242 + $0x38] sm:$0xf]
                %273 = vst [vmem:[%s243 + $0x38] sm:$0xf] %v272
                %v274 = vld [vmem:[%s242 + $0x3c] sm:$0xf]
                %275 = vst [vmem:[%s243 + $0x3c] sm:$0xf] %v274
                %v276 = vld [vmem:[%s242 + $0x40] sm:$0xf]
                %277 = vst [vmem:[%s243 + $0x40] sm:$0xf] %v276
                %v278 = vld [vmem:[%s242 + $0x44] sm:$0xf]
                %279 = vst [vmem:[%s243 + $0x44] sm:$0xf] %v278
                %v280 = vld [vmem:[%s242 + $0x90] sm:$0xf]
                %281 = vst [vmem:[%s243 + $0x48] sm:$0xf] %v280
                %v282 = vld [vmem:[%s242 + $0x94] sm:$0xf]
                %283 = vst [vmem:[%s243 + $0x4c] sm:$0xf] %v282
                %v284 = vld [vmem:[%s242 + $0x98] sm:$0xf]
                %285 = vst [vmem:[%s243 + $0x50] sm:$0xf] %v284
                %v286 = vld [vmem:[%s242 + $0x9c] sm:$0xf]
                %287 = vst [vmem:[%s243 + $0x54] sm:$0xf] %v286
                %v288 = vld [vmem:[%s242 + $0xa0] sm:$0xf]
                %289 = vst [vmem:[%s243 + $0x58] sm:$0xf] %v288
                %v290 = vld [vmem:[%s242 + $0xa4] sm:$0xf]
                %291 = vst [vmem:[%s243 + $0x5c] sm:$0xf] %v290
                %v292 = vld [vmem:[%s242 + $0xa8] sm:$0xf]
                %293 = vst [vmem:[%s243 + $0x60] sm:$0xf] %v292
                %v294 = vld [vmem:[%s242 + $0xac] sm:$0xf]
                %295 = vst [vmem:[%s243 + $0x64] sm:$0xf] %v294
                %v296 = vld [vmem:[%s242 + $0xb0] sm:$0xf]
                %297 = vst [vmem:[%s243 + $0x68] sm:$0xf] %v296
                %v298 = vld [vmem:[%s242 + $0xb4] sm:$0xf]
                %299 = vst [vmem:[%s243 + $0x6c] sm:$0xf] %v298
                %v300 = vld [vmem:[%s242 + $0xb8] sm:$0xf]
                %301 = vst [vmem:[%s243 + $0x70] sm:$0xf] %v300
                %v302 = vld [vmem:[%s242 + $0xbc] sm:$0xf]
                %303 = vst [vmem:[%s243 + $0x74] sm:$0xf] %v302
                %v304 = vld [vmem:[%s242 + $0xc0] sm:$0xf]
                %305 = vst [vmem:[%s243 + $0x78] sm:$0xf] %v304
                %v306 = vld [vmem:[%s242 + $0xc4] sm:$0xf]
                %307 = vst [vmem:[%s243 + $0x7c] sm:$0xf] %v306
                %v308 = vld [vmem:[%s242 + $0xc8] sm:$0xf]
                %309 = vst [vmem:[%s243 + $0x80] sm:$0xf] %v308
                %v310 = vld [vmem:[%s242 + $0xcc] sm:$0xf]
                %311 = vst [vmem:[%s243 + $0x84] sm:$0xf] %v310
                %v312 = vld [vmem:[%s242 + $0xd0] sm:$0xf]
                %313 = vst [vmem:[%s243 + $0x88] sm:$0xf] %v312
                %v314 = vld [vmem:[%s242 + $0xd4] sm:$0xf]
                %315 = vst [vmem:[%s243 + $0x8c] sm:$0xf] %v314
                %v316 = vld [vmem:[%s242 + $0x120] sm:$0xf]
                %317 = vst [vmem:[%s243 + $0x90] sm:$0xf] %v316
                %v318 = vld [vmem:[%s242 + $0x124] sm:$0xf]
                %319 = vst [vmem:[%s243 + $0x94] sm:$0xf] %v318
                %v320 = vld [vmem:[%s242 + $0x128] sm:$0xf]
                %321 = vst [vmem:[%s243 + $0x98] sm:$0xf] %v320
                %v322 = vld [vmem:[%s242 + $0x12c] sm:$0xf]
                %323 = vst [vmem:[%s243 + $0x9c] sm:$0xf] %v322
                %v324 = vld [vmem:[%s242 + $0x130] sm:$0xf]
                %325 = vst [vmem:[%s243 + $0xa0] sm:$0xf] %v324
                %v326 = vld [vmem:[%s242 + $0x134] sm:$0xf]
                %327 = vst [vmem:[%s243 + $0xa4] sm:$0xf] %v326
                %v328 = vld [vmem:[%s242 + $0x138] sm:$0xf]
                %329 = vst [vmem:[%s243 + $0xa8] sm:$0xf] %v328
                %v330 = vld [vmem:[%s242 + $0x13c] sm:$0xf]
                %331 = vst [vmem:[%s243 + $0xac] sm:$0xf] %v330
                %v332 = vld [vmem:[%s242 + $0x140] sm:$0xf]
                %333 = vst [vmem:[%s243 + $0xb0] sm:$0xf] %v332
                %v334 = vld [vmem:[%s242 + $0x144] sm:$0xf]
                %335 = vst [vmem:[%s243 + $0xb4] sm:$0xf] %v334
                %v336 = vld [vmem:[%s242 + $0x148] sm:$0xf]
                %337 = vst [vmem:[%s243 + $0xb8] sm:$0xf] %v336
                %v338 = vld [vmem:[%s242 + $0x14c] sm:$0xf]
                %339 = vst [vmem:[%s243 + $0xbc] sm:$0xf] %v338
                %v340 = vld [vmem:[%s242 + $0x150] sm:$0xf]
                %341 = vst [vmem:[%s243 + $0xc0] sm:$0xf] %v340
                %v342 = vld [vmem:[%s242 + $0x154] sm:$0xf]
                %343 = vst [vmem:[%s243 + $0xc4] sm:$0xf] %v342
                %v344 = vld [vmem:[%s242 + $0x158] sm:$0xf]
                %345 = vst [vmem:[%s243 + $0xc8] sm:$0xf] %v344
                %v346 = vld [vmem:[%s242 + $0x15c] sm:$0xf]
                %347 = vst [vmem:[%s243 + $0xcc] sm:$0xf] %v346
                %v348 = vld [vmem:[%s242 + $0x160] sm:$0xf]
                %349 = vst [vmem:[%s243 + $0xd0] sm:$0xf] %v348
                %v350 = vld [vmem:[%s242 + $0x164] sm:$0xf]
                %351 = vst [vmem:[%s243 + $0xd4] sm:$0xf] %v350
                %v352 = vld [vmem:[%s242 + $0x1b0] sm:$0xf]
                %353 = vst [vmem:[%s243 + $0xd8] sm:$0xf] %v352
                %v354 = vld [vmem:[%s242 + $0x1b4] sm:$0xf]
                %355 = vst [vmem:[%s243 + $0xdc] sm:$0xf] %v354
                %v356 = vld [vmem:[%s242 + $0x1b8] sm:$0xf]
                %357 = vst [vmem:[%s243 + $0xe0] sm:$0xf] %v356
                %v358 = vld [vmem:[%s242 + $0x1bc] sm:$0xf]
                %359 = vst [vmem:[%s243 + $0xe4] sm:$0xf] %v358
                %v360 = vld [vmem:[%s242 + $0x1c0] sm:$0xf]
                %361 = vst [vmem:[%s243 + $0xe8] sm:$0xf] %v360
                %v362 = vld [vmem:[%s242 + $0x1c4] sm:$0xf]
                %363 = vst [vmem:[%s243 + $0xec] sm:$0xf] %v362
                %v364 = vld [vmem:[%s242 + $0x1c8] sm:$0xf]
                %365 = vst [vmem:[%s243 + $0xf0] sm:$0xf] %v364
                %v366 = vld [vmem:[%s242 + $0x1cc] sm:$0xf]
                %367 = vst [vmem:[%s243 + $0xf4] sm:$0xf] %v366
                %v368 = vld [vmem:[%s242 + $0x1d0] sm:$0xf]
                %369 = vst [vmem:[%s243 + $0xf8] sm:$0xf] %v368
                %v370 = vld [vmem:[%s242 + $0x1d4] sm:$0xf]
                %371 = vst [vmem:[%s243 + $0xfc] sm:$0xf] %v370
                %v372 = vld [vmem:[%s242 + $0x1d8] sm:$0xf]
                %373 = vst [vmem:[%s243 + $0x100] sm:$0xf] %v372
                %v374 = vld [vmem:[%s242 + $0x1dc] sm:$0xf]
                %375 = vst [vmem:[%s243 + $0x104] sm:$0xf] %v374
                %v376 = vld [vmem:[%s242 + $0x1e0] sm:$0xf]
                %377 = vst [vmem:[%s243 + $0x108] sm:$0xf] %v376
                %v378 = vld [vmem:[%s242 + $0x1e4] sm:$0xf]
                %379 = vst [vmem:[%s243 + $0x10c] sm:$0xf] %v378
                %v380 = vld [vmem:[%s242 + $0x1e8] sm:$0xf]
                %381 = vst [vmem:[%s243 + $0x110] sm:$0xf] %v380
                %v382 = vld [vmem:[%s242 + $0x1ec] sm:$0xf]
                %383 = vst [vmem:[%s243 + $0x114] sm:$0xf] %v382
                %v384 = vld [vmem:[%s242 + $0x1f0] sm:$0xf]
                %385 = vst [vmem:[%s243 + $0x118] sm:$0xf] %v384
                %v386 = vld [vmem:[%s242 + $0x1f4] sm:$0xf]
                %387 = vst [vmem:[%s243 + $0x11c] sm:$0xf] %v386
              $region45: #{tpu_custom_call.1} parent=39 // loop_footer
                %s241 = sadd.s32 1, %s237
              $region46: #{tpu_custom_call.1} parent=39 // loop_footer_branch
                %236 = sbr.rel target = $region42
              $region47: #{tpu_custom_call.1} parent=39 // loop_exit
                _
            $region40: #{tpu_custom_call.1} parent=31 // pred_fallthru
              _
          $region32: #{tpu_custom_call.1} parent=27 // pred_fallthru
            _
          %551 = vnop
        $region28: #{tpu_custom_call.1} parent=23 // pred_fallthru
          _
      $region24: #{tpu_custom_call.1} parent=5 // pred_fallthru
        _
      %p552 = scmp.le.s32.totalorder 1, %s22
      %p553 = scmp.lt.s32.totalorder %s22, 3
      %p554 = pnand %p552, %p553
      %p555 = pneg %p554
      // Predicated region
      $region66: #{tpu_custom_call.1} parent=5 // pred_check
        _
      $region67: #{tpu_custom_call.1} parent=5 // pred_check_branch
        %557 = sbr.rel (%p554) target = $region69
      $region68: #{tpu_custom_call.1} parent=5 // pred_region
        %s558 = ssub.s32 %s22, 1
        %s559 = sand.u32 %s35, 1
        %s560 = sand.u32 %s35, 1
        %s561 = smul.addr %s560, 288
        %s562 = scalar_lea.vmem [#allocation3], %s561
        // Predicated region
        $region70: #{tpu_custom_call.1} parent=68 // pred_check
          %p563 = pneg %p48
        $region71: #{tpu_custom_call.1} parent=68 // pred_check_branch
          %565 = sbr.rel (%p563) target = $region73
        $region72: #{tpu_custom_call.1} parent=68 // pred_region
          _
        $region73: #{tpu_custom_call.1} parent=68 // pred_fallthru
          _
        %s566 = sand.u32 %s35, 1
        %s567 = sand.u32 %s35, 1
        %s568 = smul.addr %s567, 288
        %s569 = scalar_lea.vmem [#allocation3], %s568
        %p570 = pneg %p48
        %p571 = pneg %p45
        %p572 = pneg %p69
        %p573 = pneg %p66
        %p574 = pneg %p90
        %p575 = pneg %p87
        %p576 = pneg %p116
        %p577 = pneg %p113
        %s578 = sand.u32 %s103, 1
        %s579 = scalar_lea.sflag [#allocation5], %s578
        %s580 = sand.u32 %s103, 1
        %s581 = smul.addr %s580, 32
        %s582 = scalar_lea.vmem [#allocation4], %s581
        %p583 = pneg %p142
        %p584 = pneg %p139
        %s585 = sand.u32 %s27, 1
        %s586 = scalar_lea.sflag [#allocation7], %s585
        %s587 = sand.u32 %s129, 1
        %s588 = smul.addr %s587, 2
        %s589 = scalar_lea.vmem [#allocation6], %s588
        %p590 = pneg %p168
        %p591 = pneg %p165
        %s592 = sand.u32 %s27, 1
        %s593 = scalar_lea.sflag [#allocation7], %s592
        %s594 = sand.u32 %s155, 1
        %s595 = smul.addr %s594, 32
        %s596 = scalar_lea.vmem [#allocation8], %s595
        %p597 = pneg %p194
        %p598 = pneg %p191
        %s599 = sand.u32 %s181, 1
        %s600 = scalar_lea.sflag [#allocation10], %s599
        %s601 = sand.u32 %s181, 1
        %s602 = smul.addr %s601, 2
        %s603 = scalar_lea.vmem [#allocation9], %s602
        %v605 = vld [vmem:[%s562] sm:$0xf]
        %v606 = vld [vmem:[%s562 + $0x8] sm:$0xf]
        %v607 = vld [vmem:[%s562 + $0x10] sm:$0xf]
        %v608 = vld [vmem:[%s562 + $0x18] sm:$0xf]
        %v609 = vld [vmem:[%s562 + $0x20] sm:$0xf]
        %v610 = vld [vmem:[%s562 + $0x28] sm:$0xf]
        %v611 = vld [vmem:[%s562 + $0x30] sm:$0xf]
        %v612 = vld [vmem:[%s562 + $0x38] sm:$0xf]
        %v621 = vunpack.c.l.b16 %v605
        %v622 = vunpack.c.l.b16 %v606
        %v623 = vunpack.c.l.b16 %v607
        %v624 = vunpack.c.l.b16 %v608
        %v625 = vunpack.c.l.b16 %v609
        %v626 = vunpack.c.l.b16 %v610
        %v627 = vunpack.c.l.b16 %v611
        %v628 = vunpack.c.l.b16 %v612
        %v629 = vpack.c.b16 %v622, %v621
        %v630 = vpack.c.b16 %v624, %v623
        %v631 = vpack.c.b16 %v626, %v625
        %v632 = vpack.c.b16 %v628, %v627
        %637 = vst [vmem:[#allocation2] sm:$0xff] %v629
        %638 = vst [vmem:[#allocation2 + $0x48] sm:$0xff] %v630
        %639 = vst [vmem:[#allocation2 + $0x90] sm:$0xff] %v631
        %640 = vst [vmem:[#allocation2 + $0xd8] sm:$0xff] %v632
        %s641 = scalar_lea.vmem %s562, 72 [#allocation3]
        %v642 = vld [vmem:[%s641] sm:$0xf]
        %v643 = vld [vmem:[%s641 + $0x8] sm:$0xf]
        %v644 = vld [vmem:[%s641 + $0x10] sm:$0xf]
        %v645 = vld [vmem:[%s641 + $0x18] sm:$0xf]
        %v646 = vld [vmem:[%s641 + $0x20] sm:$0xf]
        %v647 = vld [vmem:[%s641 + $0x28] sm:$0xf]
        %v648 = vld [vmem:[%s641 + $0x30] sm:$0xf]
        %v649 = vld [vmem:[%s641 + $0x38] sm:$0xf]
        %v658 = vunpack.c.l.b16 %v642
        %v659 = vunpack.c.l.b16 %v643
        %v660 = vunpack.c.l.b16 %v644
        %v661 = vunpack.c.l.b16 %v645
        %v662 = vunpack.c.l.b16 %v646
        %v663 = vunpack.c.l.b16 %v647
        %v664 = vunpack.c.l.b16 %v648
        %v665 = vunpack.c.l.b16 %v649
        %v666 = vpack.c.b16 %v659, %v658
        %v667 = vpack.c.b16 %v661, %v660
        %v668 = vpack.c.b16 %v663, %v662
        %v669 = vpack.c.b16 %v665, %v664
        %674 = vst [vmem:[#allocation2 + $0x8] sm:$0xff] %v666
        %675 = vst [vmem:[#allocation2 + $0x50] sm:$0xff] %v667
        %676 = vst [vmem:[#allocation2 + $0x98] sm:$0xff] %v668
        %677 = vst [vmem:[#allocation2 + $0xe0] sm:$0xff] %v669
        %v678 = vld [vmem:[%s562] sm:$0xf]
        %v679 = vld [vmem:[%s562 + $0x4] sm:$0x1]
        %v680 = vld [vmem:[%s562 + $0x8] sm:$0xf]
        %v681 = vld [vmem:[%s562 + $0xc] sm:$0x1]
        %v682 = vld [vmem:[%s562 + $0x10] sm:$0xf]
        %v683 = vld [vmem:[%s562 + $0x14] sm:$0x1]
        %v684 = vld [vmem:[%s562 + $0x18] sm:$0xf]
        %v685 = vld [vmem:[%s562 + $0x1c] sm:$0x1]
        %v686 = vld [vmem:[%s562 + $0x20] sm:$0xf]
        %v687 = vld [vmem:[%s562 + $0x24] sm:$0x1]
        %v688 = vld [vmem:[%s562 + $0x28] sm:$0xf]
        %v689 = vld [vmem:[%s562 + $0x2c] sm:$0x1]
        %v690 = vld [vmem:[%s562 + $0x30] sm:$0xf]
        %v691 = vld [vmem:[%s562 + $0x34] sm:$0x1]
        %v692 = vld [vmem:[%s562 + $0x38] sm:$0xf]
        %v693 = vld [vmem:[%s562 + $0x3c] sm:$0x1]
        %vm694 = vsmask.f32 3328
        %vm695 = vsmask.f32 7440
        %vm696 = vmor %vm694, %vm695
        %v698 = vshrl.u32 %v678, 16
        %v700 = vrot.slane %v698, 4
        %v701 = vshll.u32 %v678, 16
        %v703 = vrot.slane %v701, 5
        %v704 = vor.u32 %v700, %v703
        %v705 = vrot.slane %v704, 4
        %v707 = vshll.u32 %v679, 16
        %v709 = vrot.slane %v707, 5
        %v710 = vsel %vm696, %v705, %v709
        %v712 = vshrl.u32 %v680, 16
        %v714 = vrot.slane %v712, 4
        %v715 = vshll.u32 %v680, 16
        %v717 = vrot.slane %v715, 5
        %v718 = vor.u32 %v714, %v717
        %v719 = vrot.slane %v718, 4
        %v721 = vshll.u32 %v681, 16
        %v723 = vrot.slane %v721, 5
        %v724 = vsel %vm696, %v719, %v723
        %v726 = vshrl.u32 %v682, 16
        %v728 = vrot.slane %v726, 4
        %v729 = vshll.u32 %v682, 16
        %v731 = vrot.slane %v729, 5
        %v732 = vor.u32 %v728, %v731
        %v733 = vrot.slane %v732, 4
        %v735 = vshll.u32 %v683, 16
        %v737 = vrot.slane %v735, 5
        %v738 = vsel %vm696, %v733, %v737
        %v740 = vshrl.u32 %v684, 16
        %v742 = vrot.slane %v740, 4
        %v743 = vshll.u32 %v684, 16
        %v745 = vrot.slane %v743, 5
        %v746 = vor.u32 %v742, %v745
        %v747 = vrot.slane %v746, 4
        %v749 = vshll.u32 %v685, 16
        %v751 = vrot.slane %v749, 5
        %v752 = vsel %vm696, %v747, %v751
        %v754 = vshrl.u32 %v686, 16
        %v756 = vrot.slane %v754, 4
        %v757 = vshll.u32 %v686, 16
        %v759 = vrot.slane %v757, 5
        %v760 = vor.u32 %v756, %v759
        %v761 = vrot.slane %v760, 4
        %v763 = vshll.u32 %v687, 16
        %v765 = vrot.slane %v763, 5
        %v766 = vsel %vm696, %v761, %v765
        %v768 = vshrl.u32 %v688, 16
        %v770 = vrot.slane %v768, 4
        %v771 = vshll.u32 %v688, 16
        %v773 = vrot.slane %v771, 5
        %v774 = vor.u32 %v770, %v773
        %v775 = vrot.slane %v774, 4
        %v777 = vshll.u32 %v689, 16
        %v779 = vrot.slane %v777, 5
        %v780 = vsel %vm696, %v775, %v779
        %v782 = vshrl.u32 %v690, 16
        %v784 = vrot.slane %v782, 4
        %v785 = vshll.u32 %v690, 16
        %v787 = vrot.slane %v785, 5
        %v788 = vor.u32 %v784, %v787
        %v789 = vrot.slane %v788, 4
        %v791 = vshll.u32 %v691, 16
        %v793 = vrot.slane %v791, 5
        %v794 = vsel %vm696, %v789, %v793
        %v796 = vshrl.u32 %v692, 16
        %v798 = vrot.slane %v796, 4
        %v799 = vshll.u32 %v692, 16
        %v801 = vrot.slane %v799, 5
        %v802 = vor.u32 %v798, %v801
        %v803 = vrot.slane %v802, 4
        %v805 = vshll.u32 %v693, 16
        %v807 = vrot.slane %v805, 5
        %v808 = vsel %vm696, %v803, %v807
        %v809 = vunpack.c.l.b16 %v710
        %v810 = vunpack.c.l.b16 %v724
        %v811 = vunpack.c.l.b16 %v738
        %v812 = vunpack.c.l.b16 %v752
        %v813 = vunpack.c.l.b16 %v766
        %v814 = vunpack.c.l.b16 %v780
        %v815 = vunpack.c.l.b16 %v794
        %v816 = vunpack.c.l.b16 %v808
        %v817 = vpack.c.b16 %v810, %v809
        %v818 = vpack.c.b16 %v812, %v811
        %v819 = vpack.c.b16 %v814, %v813
        %v820 = vpack.c.b16 %v816, %v815
        %825 = vst [vmem:[#allocation2 + $0x10] sm:$0xff] %v817
        %826 = vst [vmem:[#allocation2 + $0x58] sm:$0xff] %v818
        %827 = vst [vmem:[#allocation2 + $0xa0] sm:$0xff] %v819
        %828 = vst [vmem:[#allocation2 + $0xe8] sm:$0xff] %v820
        %s829 = scalar_lea.vmem %s562, 144 [#allocation3]
        %v830 = vld [vmem:[%s829] sm:$0xf]
        %v831 = vld [vmem:[%s829 + $0x8] sm:$0xf]
        %v832 = vld [vmem:[%s829 + $0x10] sm:$0xf]
        %v833 = vld [vmem:[%s829 + $0x18] sm:$0xf]
        %v834 = vld [vmem:[%s829 + $0x20] sm:$0xf]
        %v835 = vld [vmem:[%s829 + $0x28] sm:$0xf]
        %v836 = vld [vmem:[%s829 + $0x30] sm:$0xf]
        %v837 = vld [vmem:[%s829 + $0x38] sm:$0xf]
        %v846 = vunpack.c.l.b16 %v830
        %v847 = vunpack.c.l.b16 %v831
        %v848 = vunpack.c.l.b16 %v832
        %v849 = vunpack.c.l.b16 %v833
        %v850 = vunpack.c.l.b16 %v834
        %v851 = vunpack.c.l.b16 %v835
        %v852 = vunpack.c.l.b16 %v836
        %v853 = vunpack.c.l.b16 %v837
        %v854 = vpack.c.b16 %v847, %v846
        %v855 = vpack.c.b16 %v849, %v848
        %v856 = vpack.c.b16 %v851, %v850
        %v857 = vpack.c.b16 %v853, %v852
        %862 = vst [vmem:[#allocation2 + $0x18] sm:$0xff] %v854
        %863 = vst [vmem:[#allocation2 + $0x60] sm:$0xff] %v855
        %864 = vst [vmem:[#allocation2 + $0xa8] sm:$0xff] %v856
        %865 = vst [vmem:[#allocation2 + $0xf0] sm:$0xff] %v857
        %s866 = scalar_lea.vmem %s562, 216 [#allocation3]
        %v867 = vld [vmem:[%s866] sm:$0xf]
        %v868 = vld [vmem:[%s866 + $0x8] sm:$0xf]
        %v869 = vld [vmem:[%s866 + $0x10] sm:$0xf]
        %v870 = vld [vmem:[%s866 + $0x18] sm:$0xf]
        %v871 = vld [vmem:[%s866 + $0x20] sm:$0xf]
        %v872 = vld [vmem:[%s866 + $0x28] sm:$0xf]
        %v873 = vld [vmem:[%s866 + $0x30] sm:$0xf]
        %v874 = vld [vmem:[%s866 + $0x38] sm:$0xf]
        %v883 = vunpack.c.l.b16 %v867
        %v884 = vunpack.c.l.b16 %v868
        %v885 = vunpack.c.l.b16 %v869
        %v886 = vunpack.c.l.b16 %v870
        %v887 = vunpack.c.l.b16 %v871
        %v888 = vunpack.c.l.b16 %v872
        %v889 = vunpack.c.l.b16 %v873
        %v890 = vunpack.c.l.b16 %v874
        %v891 = vpack.c.b16 %v884, %v883
        %v892 = vpack.c.b16 %v886, %v885
        %v893 = vpack.c.b16 %v888, %v887
        %v894 = vpack.c.b16 %v890, %v889
        %899 = vst [vmem:[#allocation2 + $0x20] sm:$0xff] %v891
        %900 = vst [vmem:[#allocation2 + $0x68] sm:$0xff] %v892
        %901 = vst [vmem:[#allocation2 + $0xb0] sm:$0xff] %v893
        %902 = vst [vmem:[#allocation2 + $0xf8] sm:$0xff] %v894
        %v903 = vld [vmem:[%s829] sm:$0xf]
        %v904 = vld [vmem:[%s829 + $0x4] sm:$0x1]
        %v905 = vld [vmem:[%s829 + $0x8] sm:$0xf]
        %v906 = vld [vmem:[%s829 + $0xc] sm:$0x1]
        %v907 = vld [vmem:[%s829 + $0x10] sm:$0xf]
        %v908 = vld [vmem:[%s829 + $0x14] sm:$0x1]
        %v909 = vld [vmem:[%s829 + $0x18] sm:$0xf]
        %v910 = vld [vmem:[%s829 + $0x1c] sm:$0x1]
        %v911 = vld [vmem:[%s829 + $0x20] sm:$0xf]
        %v912 = vld [vmem:[%s829 + $0x24] sm:$0x1]
        %v913 = vld [vmem:[%s829 + $0x28] sm:$0xf]
        %v914 = vld [vmem:[%s829 + $0x2c] sm:$0x1]
        %v915 = vld [vmem:[%s829 + $0x30] sm:$0xf]
        %v916 = vld [vmem:[%s829 + $0x34] sm:$0x1]
        %v917 = vld [vmem:[%s829 + $0x38] sm:$0xf]
        %v918 = vld [vmem:[%s829 + $0x3c] sm:$0x1]
        %v920 = vshrl.u32 %v903, 16
        %v922 = vrot.slane %v920, 4
        %v923 = vshll.u32 %v903, 16
        %v925 = vrot.slane %v923, 5
        %v926 = vor.u32 %v922, %v925
        %v927 = vrot.slane %v926, 4
        %v929 = vshll.u32 %v904, 16
        %v931 = vrot.slane %v929, 5
        %v932 = vsel %vm696, %v927, %v931
        %v934 = vshrl.u32 %v905, 16
        %v936 = vrot.slane %v934, 4
        %v937 = vshll.u32 %v905, 16
        %v939 = vrot.slane %v937, 5
        %v940 = vor.u32 %v936, %v939
        %v941 = vrot.slane %v940, 4
        %v943 = vshll.u32 %v906, 16
        %v945 = vrot.slane %v943, 5
        %v946 = vsel %vm696, %v941, %v945
        %v948 = vshrl.u32 %v907, 16
        %v950 = vrot.slane %v948, 4
        %v951 = vshll.u32 %v907, 16
        %v953 = vrot.slane %v951, 5
        %v954 = vor.u32 %v950, %v953
        %v955 = vrot.slane %v954, 4
        %v957 = vshll.u32 %v908, 16
        %v959 = vrot.slane %v957, 5
        %v960 = vsel %vm696, %v955, %v959
        %v962 = vshrl.u32 %v909, 16
        %v964 = vrot.slane %v962, 4
        %v965 = vshll.u32 %v909, 16
        %v967 = vrot.slane %v965, 5
        %v968 = vor.u32 %v964, %v967
        %v969 = vrot.slane %v968, 4
        %v971 = vshll.u32 %v910, 16
        %v973 = vrot.slane %v971, 5
        %v974 = vsel %vm696, %v969, %v973
        %v976 = vshrl.u32 %v911, 16
        %v978 = vrot.slane %v976, 4
        %v979 = vshll.u32 %v911, 16
        %v981 = vrot.slane %v979, 5
        %v982 = vor.u32 %v978, %v981
        %v983 = vrot.slane %v982, 4
        %v985 = vshll.u32 %v912, 16
        %v987 = vrot.slane %v985, 5
        %v988 = vsel %vm696, %v983, %v987
        %v990 = vshrl.u32 %v913, 16
        %v992 = vrot.slane %v990, 4
        %v993 = vshll.u32 %v913, 16
        %v995 = vrot.slane %v993, 5
        %v996 = vor.u32 %v992, %v995
        %v997 = vrot.slane %v996, 4
        %v999 = vshll.u32 %v914, 16
        %v1001 = vrot.slane %v999, 5
        %v1002 = vsel %vm696, %v997, %v1001
        %v1004 = vshrl.u32 %v915, 16
        %v1006 = vrot.slane %v1004, 4
        %v1007 = vshll.u32 %v915, 16
        %v1009 = vrot.slane %v1007, 5
        %v1010 = vor.u32 %v1006, %v1009
        %v1011 = vrot.slane %v1010, 4
        %v1013 = vshll.u32 %v916, 16
        %v1015 = vrot.slane %v1013, 5
        %v1016 = vsel %vm696, %v1011, %v1015
        %v1018 = vshrl.u32 %v917, 16
        %v1020 = vrot.slane %v1018, 4
        %v1021 = vshll.u32 %v917, 16
        %v1023 = vrot.slane %v1021, 5
        %v1024 = vor.u32 %v1020, %v1023
        %v1025 = vrot.slane %v1024, 4
        %v1027 = vshll.u32 %v918, 16
        %v1029 = vrot.slane %v1027, 5
        %v1030 = vsel %vm696, %v1025, %v1029
        %v1031 = vunpack.c.l.b16 %v932
        %v1032 = vunpack.c.l.b16 %v946
        %v1033 = vunpack.c.l.b16 %v960
        %v1034 = vunpack.c.l.b16 %v974
        %v1035 = vunpack.c.l.b16 %v988
        %v1036 = vunpack.c.l.b16 %v1002
        %v1037 = vunpack.c.l.b16 %v1016
        %v1038 = vunpack.c.l.b16 %v1030
        %v1039 = vpack.c.b16 %v1032, %v1031
        %v1040 = vpack.c.b16 %v1034, %v1033
        %v1041 = vpack.c.b16 %v1036, %v1035
        %v1042 = vpack.c.b16 %v1038, %v1037
        %1047 = vst [vmem:[#allocation2 + $0x28] sm:$0xff] %v1039
        %1048 = vst [vmem:[#allocation2 + $0x70] sm:$0xff] %v1040
        %1049 = vst [vmem:[#allocation2 + $0xb8] sm:$0xff] %v1041
        %1050 = vst [vmem:[#allocation2 + $0x100] sm:$0xff] %v1042
        %s1051 = scalar_lea.vmem %s562, 8 [#allocation3]
        %v1052 = vld [vmem:[%s1051] sm:$0xf]
        %v1053 = vld [vmem:[%s1051 + $0x8] sm:$0xf]
        %v1054 = vld [vmem:[%s1051 + $0x10] sm:$0xf]
        %v1055 = vld [vmem:[%s1051 + $0x18] sm:$0xf]
        %v1056 = vld [vmem:[%s1051 + $0x20] sm:$0xf]
        %v1057 = vld [vmem:[%s1051 + $0x28] sm:$0xf]
        %v1058 = vld [vmem:[%s1051 + $0x30] sm:$0xf]
        %v1059 = vld [vmem:[%s1051 + $0x38] sm:$0xf]
        %v1068 = vunpack.c.l.b16 %v1052
        %v1069 = vunpack.c.l.b16 %v1053
        %v1070 = vunpack.c.l.b16 %v1054
        %v1071 = vunpack.c.l.b16 %v1055
        %v1072 = vunpack.c.l.b16 %v1056
        %v1073 = vunpack.c.l.b16 %v1057
        %v1074 = vunpack.c.l.b16 %v1058
        %v1075 = vunpack.c.l.b16 %v1059
        %v1076 = vpack.c.b16 %v1069, %v1068
        %v1077 = vpack.c.b16 %v1071, %v1070
        %v1078 = vpack.c.b16 %v1073, %v1072
        %v1079 = vpack.c.b16 %v1075, %v1074
        %1084 = vst [vmem:[#allocation2 + $0x30] sm:$0xff] %v1076
        %1085 = vst [vmem:[#allocation2 + $0x78] sm:$0xff] %v1077
        %1086 = vst [vmem:[#allocation2 + $0xc0] sm:$0xff] %v1078
        %1087 = vst [vmem:[#allocation2 + $0x108] sm:$0xff] %v1079
        %s1088 = scalar_lea.vmem %s562, 80 [#allocation3]
        %v1089 = vld [vmem:[%s1088] sm:$0xf]
        %v1090 = vld [vmem:[%s1088 + $0x8] sm:$0xf]
        %v1091 = vld [vmem:[%s1088 + $0x10] sm:$0xf]
        %v1092 = vld [vmem:[%s1088 + $0x18] sm:$0xf]
        %v1093 = vld [vmem:[%s1088 + $0x20] sm:$0xf]
        %v1094 = vld [vmem:[%s1088 + $0x28] sm:$0xf]
        %v1095 = vld [vmem:[%s1088 + $0x30] sm:$0xf]
        %v1096 = vld [vmem:[%s1088 + $0x38] sm:$0xf]
        %v1105 = vunpack.c.l.b16 %v1089
        %v1106 = vunpack.c.l.b16 %v1090
        %v1107 = vunpack.c.l.b16 %v1091
        %v1108 = vunpack.c.l.b16 %v1092
        %v1109 = vunpack.c.l.b16 %v1093
        %v1110 = vunpack.c.l.b16 %v1094
        %v1111 = vunpack.c.l.b16 %v1095
        %v1112 = vunpack.c.l.b16 %v1096
        %v1113 = vpack.c.b16 %v1106, %v1105
        %v1114 = vpack.c.b16 %v1108, %v1107
        %v1115 = vpack.c.b16 %v1110, %v1109
        %v1116 = vpack.c.b16 %v1112, %v1111
        %1121 = vst [vmem:[#allocation2 + $0x38] sm:$0xff] %v1113
        %1122 = vst [vmem:[#allocation2 + $0x80] sm:$0xff] %v1114
        %1123 = vst [vmem:[#allocation2 + $0xc8] sm:$0xff] %v1115
        %1124 = vst [vmem:[#allocation2 + $0x110] sm:$0xff] %v1116
        %v1125 = vld [vmem:[%s1051] sm:$0xf]
        %v1126 = vld [vmem:[%s1051 + $0x4] sm:$0x1]
        %v1127 = vld [vmem:[%s1051 + $0x8] sm:$0xf]
        %v1128 = vld [vmem:[%s1051 + $0xc] sm:$0x1]
        %v1129 = vld [vmem:[%s1051 + $0x10] sm:$0xf]
        %v1130 = vld [vmem:[%s1051 + $0x14] sm:$0x1]
        %v1131 = vld [vmem:[%s1051 + $0x18] sm:$0xf]
        %v1132 = vld [vmem:[%s1051 + $0x1c] sm:$0x1]
        %v1133 = vld [vmem:[%s1051 + $0x20] sm:$0xf]
        %v1134 = vld [vmem:[%s1051 + $0x24] sm:$0x1]
        %v1135 = vld [vmem:[%s1051 + $0x28] sm:$0xf]
        %v1136 = vld [vmem:[%s1051 + $0x2c] sm:$0x1]
        %v1137 = vld [vmem:[%s1051 + $0x30] sm:$0xf]
        %v1138 = vld [vmem:[%s1051 + $0x34] sm:$0x1]
        %v1139 = vld [vmem:[%s1051 + $0x38] sm:$0xf]
        %v1140 = vld [vmem:[%s1051 + $0x3c] sm:$0x1]
        %v1142 = vshrl.u32 %v1125, 16
        %v1144 = vrot.slane %v1142, 4
        %v1145 = vshll.u32 %v1125, 16
        %v1147 = vrot.slane %v1145, 5
        %v1148 = vor.u32 %v1144, %v1147
        %v1149 = vrot.slane %v1148, 4
        %v1151 = vshll.u32 %v1126, 16
        %v1153 = vrot.slane %v1151, 5
        %v1154 = vsel %vm696, %v1149, %v1153
        %v1156 = vshrl.u32 %v1127, 16
        %v1158 = vrot.slane %v1156, 4
        %v1159 = vshll.u32 %v1127, 16
        %v1161 = vrot.slane %v1159, 5
        %v1162 = vor.u32 %v1158, %v1161
        %v1163 = vrot.slane %v1162, 4
        %v1165 = vshll.u32 %v1128, 16
        %v1167 = vrot.slane %v1165, 5
        %v1168 = vsel %vm696, %v1163, %v1167
        %v1170 = vshrl.u32 %v1129, 16
        %v1172 = vrot.slane %v1170, 4
        %v1173 = vshll.u32 %v1129, 16
        %v1175 = vrot.slane %v1173, 5
        %v1176 = vor.u32 %v1172, %v1175
        %v1177 = vrot.slane %v1176, 4
        %v1179 = vshll.u32 %v1130, 16
        %v1181 = vrot.slane %v1179, 5
        %v1182 = vsel %vm696, %v1177, %v1181
        %v1184 = vshrl.u32 %v1131, 16
        %v1186 = vrot.slane %v1184, 4
        %v1187 = vshll.u32 %v1131, 16
        %v1189 = vrot.slane %v1187, 5
        %v1190 = vor.u32 %v1186, %v1189
        %v1191 = vrot.slane %v1190, 4
        %v1193 = vshll.u32 %v1132, 16
        %v1195 = vrot.slane %v1193, 5
        %v1196 = vsel %vm696, %v1191, %v1195
        %v1198 = vshrl.u32 %v1133, 16
        %v1200 = vrot.slane %v1198, 4
        %v1201 = vshll.u32 %v1133, 16
        %v1203 = vrot.slane %v1201, 5
        %v1204 = vor.u32 %v1200, %v1203
        %v1205 = vrot.slane %v1204, 4
        %v1207 = vshll.u32 %v1134, 16
        %v1209 = vrot.slane %v1207, 5
        %v1210 = vsel %vm696, %v1205, %v1209
        %v1212 = vshrl.u32 %v1135, 16
        %v1214 = vrot.slane %v1212, 4
        %v1215 = vshll.u32 %v1135, 16
        %v1217 = vrot.slane %v1215, 5
        %v1218 = vor.u32 %v1214, %v1217
        %v1219 = vrot.slane %v1218, 4
        %v1221 = vshll.u32 %v1136, 16
        %v1223 = vrot.slane %v1221, 5
        %v1224 = vsel %vm696, %v1219, %v1223
        %v1226 = vshrl.u32 %v1137, 16
        %v1228 = vrot.slane %v1226, 4
        %v1229 = vshll.u32 %v1137, 16
        %v1231 = vrot.slane %v1229, 5
        %v1232 = vor.u32 %v1228, %v1231
        %v1233 = vrot.slane %v1232, 4
        %v1235 = vshll.u32 %v1138, 16
        %v1237 = vrot.slane %v1235, 5
        %v1238 = vsel %vm696, %v1233, %v1237
        %v1240 = vshrl.u32 %v1139, 16
        %v1242 = vrot.slane %v1240, 4
        %v1243 = vshll.u32 %v1139, 16
        %v1245 = vrot.slane %v1243, 5
        %v1246 = vor.u32 %v1242, %v1245
        %v1247 = vrot.slane %v1246, 4
        %v1249 = vshll.u32 %v1140, 16
        %v1251 = vrot.slane %v1249, 5
        %v1252 = vsel %vm696, %v1247, %v1251
        %v1253 = vunpack.c.l.b16 %v1154
        %v1254 = vunpack.c.l.b16 %v1168
        %v1255 = vunpack.c.l.b16 %v1182
        %v1256 = vunpack.c.l.b16 %v1196
        %v1257 = vunpack.c.l.b16 %v1210
        %v1258 = vunpack.c.l.b16 %v1224
        %v1259 = vunpack.c.l.b16 %v1238
        %v1260 = vunpack.c.l.b16 %v1252
        %v1261 = vpack.c.b16 %v1254, %v1253
        %v1262 = vpack.c.b16 %v1256, %v1255
        %v1263 = vpack.c.b16 %v1258, %v1257
        %v1264 = vpack.c.b16 %v1260, %v1259
        %1269 = vst [vmem:[#allocation2 + $0x40] sm:$0xff] %v1261
        %1270 = vst [vmem:[#allocation2 + $0x88] sm:$0xff] %v1262
        %1271 = vst [vmem:[#allocation2 + $0xd0] sm:$0xff] %v1263
        %1272 = vst [vmem:[#allocation2 + $0x118] sm:$0xff] %v1264
        %v1273 = vld [vmem:[#allocation2] sm:$0xff]
        %v1274 = vld [vmem:[#allocation2 + $0x8] sm:$0xff]
        %v1275 = vld [vmem:[#allocation2 + $0x10] sm:$0xff]
        %v1276 = vld [vmem:[#allocation2 + $0x18] sm:$0xff]
        %v1277 = vld [vmem:[#allocation2 + $0x20] sm:$0xff]
        %v1278 = vld [vmem:[#allocation2 + $0x28] sm:$0xff]
        %v1279 = vld [vmem:[#allocation2 + $0x30] sm:$0xff]
        %v1280 = vld [vmem:[#allocation2 + $0x38] sm:$0xff]
        %v1281 = vld [vmem:[#allocation2 + $0x40] sm:$0xff]
        %v1282 = vld [vmem:[#allocation2 + $0x48] sm:$0xff]
        %v1283 = vld [vmem:[#allocation2 + $0x50] sm:$0xff]
        %v1284 = vld [vmem:[#allocation2 + $0x58] sm:$0xff]
        %v1285 = vld [vmem:[#allocation2 + $0x60] sm:$0xff]
        %v1286 = vld [vmem:[#allocation2 + $0x68] sm:$0xff]
        %v1287 = vld [vmem:[#allocation2 + $0x70] sm:$0xff]
        %v1288 = vld [vmem:[#allocation2 + $0x78] sm:$0xff]
        %v1289 = vld [vmem:[#allocation2 + $0x80] sm:$0xff]
        %v1290 = vld [vmem:[#allocation2 + $0x88] sm:$0xff]
        %v1291 = vld [vmem:[#allocation2 + $0x90] sm:$0xff]
        %v1292 = vld [vmem:[#allocation2 + $0x98] sm:$0xff]
        %v1293 = vld [vmem:[#allocation2 + $0xa0] sm:$0xff]
        %v1294 = vld [vmem:[#allocation2 + $0xa8] sm:$0xff]
        %v1295 = vld [vmem:[#allocation2 + $0xb0] sm:$0xff]
        %v1296 = vld [vmem:[#allocation2 + $0xb8] sm:$0xff]
        %v1297 = vld [vmem:[#allocation2 + $0xc0] sm:$0xff]
        %v1298 = vld [vmem:[#allocation2 + $0xc8] sm:$0xff]
        %v1299 = vld [vmem:[#allocation2 + $0xd0] sm:$0xff]
        %v1300 = vld [vmem:[#allocation2 + $0xd8] sm:$0xff]
        %v1301 = vld [vmem:[#allocation2 + $0xe0] sm:$0xff]
        %v1302 = vld [vmem:[#allocation2 + $0xe8] sm:$0xff]
        %v1303 = vld [vmem:[#allocation2 + $0xf0] sm:$0xff]
        %v1304 = vld [vmem:[#allocation2 + $0xf8] sm:$0xff]
        %v1305 = vld [vmem:[#allocation2 + $0x100] sm:$0xff]
        %v1306 = vld [vmem:[#allocation2 + $0x108] sm:$0xff]
        %v1307 = vld [vmem:[#allocation2 + $0x110] sm:$0xff]
        %v1308 = vld [vmem:[#allocation2 + $0x118] sm:$0xff]
        %v1309 = vld [vmem:[%s1] sm:$0xf]
        %v1310 = vld [vmem:[%s1 + $0x4] sm:$0xf]
        %v1311 = vld [vmem:[%s1 + $0x8] sm:$0xf]
        %v1312 = vld [vmem:[%s1 + $0xc] sm:$0xf]
        %v1313 = vld [vmem:[%s1 + $0x10] sm:$0xf]
        %v1314 = vld [vmem:[%s1 + $0x14] sm:$0xf]
        %v1315 = vld [vmem:[%s1 + $0x18] sm:$0xf]
        %v1316 = vld [vmem:[%s1 + $0x1c] sm:$0xf]
        %v1317 = vld [vmem:[%s1 + $0x20] sm:$0xf]
        %v1318 = vld [vmem:[%s1 + $0x24] sm:$0xf]
        %v1319 = vld [vmem:[%s1 + $0x28] sm:$0xf]
        %v1320 = vld [vmem:[%s1 + $0x2c] sm:$0xf]
        %v1321 = vld [vmem:[%s1 + $0x30] sm:$0xf]
        %v1322 = vld [vmem:[%s1 + $0x34] sm:$0xf]
        %v1323 = vld [vmem:[%s1 + $0x38] sm:$0xf]
        %v1324 = vld [vmem:[%s1 + $0x3c] sm:$0xf]
        %v1325 = vld [vmem:[%s1 + $0x40] sm:$0xf]
        %v1326 = vld [vmem:[%s1 + $0x44] sm:$0xf]
        %v1327 = vld [vmem:[%s1 + $0x48] sm:$0xf]
        %v1328 = vld [vmem:[%s1 + $0x4c] sm:$0xf]
        %v1329 = vld [vmem:[%s1 + $0x50] sm:$0xf]
        %v1330 = vld [vmem:[%s1 + $0x54] sm:$0xf]
        %v1331 = vld [vmem:[%s1 + $0x58] sm:$0xf]
        %v1332 = vld [vmem:[%s1 + $0x5c] sm:$0xf]
        %v1333 = vld [vmem:[%s1 + $0x60] sm:$0xf]
        %v1334 = vld [vmem:[%s1 + $0x64] sm:$0xf]
        %v1335 = vld [vmem:[%s1 + $0x68] sm:$0xf]
        %v1336 = vld [vmem:[%s1 + $0x6c] sm:$0xf]
        %v1337 = vld [vmem:[%s1 + $0x70] sm:$0xf]
        %v1338 = vld [vmem:[%s1 + $0x74] sm:$0xf]
        %v1339 = vld [vmem:[%s1 + $0x78] sm:$0xf]
        %v1340 = vld [vmem:[%s1 + $0x7c] sm:$0xf]
        %v1341 = vld [vmem:[%s1 + $0x80] sm:$0xf]
        %v1342 = vld [vmem:[%s1 + $0x84] sm:$0xf]
        %v1343 = vld [vmem:[%s1 + $0x88] sm:$0xf]
        %v1344 = vld [vmem:[%s1 + $0x8c] sm:$0xf]
        %v1345 = vld [vmem:[%s1 + $0x90] sm:$0xf]
        %v1346 = vld [vmem:[%s1 + $0x94] sm:$0xf]
        %v1347 = vld [vmem:[%s1 + $0x98] sm:$0xf]
        %v1348 = vld [vmem:[%s1 + $0x9c] sm:$0xf]
        %v1349 = vld [vmem:[%s1 + $0xa0] sm:$0xf]
        %v1350 = vld [vmem:[%s1 + $0xa4] sm:$0xf]
        %v1351 = vld [vmem:[%s1 + $0xa8] sm:$0xf]
        %v1352 = vld [vmem:[%s1 + $0xac] sm:$0xf]
        %v1353 = vld [vmem:[%s1 + $0xb0] sm:$0xf]
        %v1354 = vld [vmem:[%s1 + $0xb4] sm:$0xf]
        %v1355 = vld [vmem:[%s1 + $0xb8] sm:$0xf]
        %v1356 = vld [vmem:[%s1 + $0xbc] sm:$0xf]
        %v1357 = vld [vmem:[%s1 + $0xc0] sm:$0xf]
        %v1358 = vld [vmem:[%s1 + $0xc4] sm:$0xf]
        %v1359 = vld [vmem:[%s1 + $0xc8] sm:$0xf]
        %v1360 = vld [vmem:[%s1 + $0xcc] sm:$0xf]
        %v1361 = vld [vmem:[%s1 + $0xd0] sm:$0xf]
        %v1362 = vld [vmem:[%s1 + $0xd4] sm:$0xf]
        %v1363 = vld [vmem:[%s1 + $0xd8] sm:$0xf]
        %v1364 = vld [vmem:[%s1 + $0xdc] sm:$0xf]
        %v1365 = vld [vmem:[%s1 + $0xe0] sm:$0xf]
        %v1366 = vld [vmem:[%s1 + $0xe4] sm:$0xf]
        %v1367 = vld [vmem:[%s1 + $0xe8] sm:$0xf]
        %v1368 = vld [vmem:[%s1 + $0xec] sm:$0xf]
        %v1369 = vld [vmem:[%s1 + $0xf0] sm:$0xf]
        %v1370 = vld [vmem:[%s1 + $0xf4] sm:$0xf]
        %v1371 = vld [vmem:[%s1 + $0xf8] sm:$0xf]
        %v1372 = vld [vmem:[%s1 + $0xfc] sm:$0xf]
        %v1373 = vld [vmem:[%s1 + $0x100] sm:$0xf]
        %v1374 = vld [vmem:[%s1 + $0x104] sm:$0xf]
        %v1375 = vld [vmem:[%s1 + $0x108] sm:$0xf]
        %v1376 = vld [vmem:[%s1 + $0x10c] sm:$0xf]
        %v1377 = vld [vmem:[%s1 + $0x110] sm:$0xf]
        %v1378 = vld [vmem:[%s1 + $0x114] sm:$0xf]
        %v1379 = vld [vmem:[%s1 + $0x118] sm:$0xf]
        %v1380 = vld [vmem:[%s1 + $0x11c] sm:$0xf]
        %v1381 = vld [vmem:[%s1 + $0x120] sm:$0xf]
        %v1382 = vld [vmem:[%s1 + $0x124] sm:$0xf]
        %v1383 = vld [vmem:[%s1 + $0x128] sm:$0xf]
        %v1384 = vld [vmem:[%s1 + $0x12c] sm:$0xf]
        %v1385 = vld [vmem:[%s1 + $0x130] sm:$0xf]
        %v1386 = vld [vmem:[%s1 + $0x134] sm:$0xf]
        %v1387 = vld [vmem:[%s1 + $0x138] sm:$0xf]
        %v1388 = vld [vmem:[%s1 + $0x13c] sm:$0xf]
        %v1389 = vld [vmem:[%s1 + $0x140] sm:$0xf]
        %v1390 = vld [vmem:[%s1 + $0x144] sm:$0xf]
        %v1391 = vld [vmem:[%s1 + $0x148] sm:$0xf]
        %v1392 = vld [vmem:[%s1 + $0x14c] sm:$0xf]
        %v1393 = vld [vmem:[%s1 + $0x150] sm:$0xf]
        %v1394 = vld [vmem:[%s1 + $0x154] sm:$0xf]
        %v1395 = vld [vmem:[%s1 + $0x158] sm:$0xf]
        %v1396 = vld [vmem:[%s1 + $0x15c] sm:$0xf]
        %v1397 = vld [vmem:[%s1 + $0x160] sm:$0xf]
        %v1398 = vld [vmem:[%s1 + $0x164] sm:$0xf]
        %v1399 = vld [vmem:[%s1 + $0x168] sm:$0xf]
        %v1400 = vld [vmem:[%s1 + $0x16c] sm:$0xf]
        %v1401 = vld [vmem:[%s1 + $0x170] sm:$0xf]
        %v1402 = vld [vmem:[%s1 + $0x174] sm:$0xf]
        %v1403 = vld [vmem:[%s1 + $0x178] sm:$0xf]
        %v1404 = vld [vmem:[%s1 + $0x17c] sm:$0xf]
        %v1405 = vld [vmem:[%s1 + $0x180] sm:$0xf]
        %v1406 = vld [vmem:[%s1 + $0x184] sm:$0xf]
        %v1407 = vld [vmem:[%s1 + $0x188] sm:$0xf]
        %v1408 = vld [vmem:[%s1 + $0x18c] sm:$0xf]
        %v1409 = vld [vmem:[%s1 + $0x190] sm:$0xf]
        %v1410 = vld [vmem:[%s1 + $0x194] sm:$0xf]
        %v1411 = vld [vmem:[%s1 + $0x198] sm:$0xf]
        %v1412 = vld [vmem:[%s1 + $0x19c] sm:$0xf]
        %v1413 = vld [vmem:[%s1 + $0x1a0] sm:$0xf]
        %v1414 = vld [vmem:[%s1 + $0x1a4] sm:$0xf]
        %v1415 = vld [vmem:[%s1 + $0x1a8] sm:$0xf]
        %v1416 = vld [vmem:[%s1 + $0x1ac] sm:$0xf]
        %v1417 = vld [vmem:[%s1 + $0x1b0] sm:$0xf]
        %v1418 = vld [vmem:[%s1 + $0x1b4] sm:$0xf]
        %v1419 = vld [vmem:[%s1 + $0x1b8] sm:$0xf]
        %v1420 = vld [vmem:[%s1 + $0x1bc] sm:$0xf]
        %v1421 = vld [vmem:[%s1 + $0x1c0] sm:$0xf]
        %v1422 = vld [vmem:[%s1 + $0x1c4] sm:$0xf]
        %v1423 = vld [vmem:[%s1 + $0x1c8] sm:$0xf]
        %v1424 = vld [vmem:[%s1 + $0x1cc] sm:$0xf]
        %v1425 = vld [vmem:[%s1 + $0x1d0] sm:$0xf]
        %v1426 = vld [vmem:[%s1 + $0x1d4] sm:$0xf]
        %v1427 = vld [vmem:[%s1 + $0x1d8] sm:$0xf]
        %v1428 = vld [vmem:[%s1 + $0x1dc] sm:$0xf]
        %v1429 = vld [vmem:[%s1 + $0x1e0] sm:$0xf]
        %v1430 = vld [vmem:[%s1 + $0x1e4] sm:$0xf]
        %v1431 = vld [vmem:[%s1 + $0x1e8] sm:$0xf]
        %v1432 = vld [vmem:[%s1 + $0x1ec] sm:$0xf]
        %v1433 = vld [vmem:[%s1 + $0x1f0] sm:$0xf]
        %v1434 = vld [vmem:[%s1 + $0x1f4] sm:$0xf]
        %v1435 = vld [vmem:[%s1 + $0x1f8] sm:$0xf]
        %v1436 = vld [vmem:[%s1 + $0x1fc] sm:$0xf]
        %v1437 = vld [vmem:[%s1 + $0x200] sm:$0xf]
        %v1438 = vld [vmem:[%s1 + $0x204] sm:$0xf]
        %v1439 = vld [vmem:[%s1 + $0x208] sm:$0xf]
        %v1440 = vld [vmem:[%s1 + $0x20c] sm:$0xf]
        %v1441 = vld [vmem:[%s1 + $0x210] sm:$0xf]
        %v1442 = vld [vmem:[%s1 + $0x214] sm:$0xf]
        %v1443 = vld [vmem:[%s1 + $0x218] sm:$0xf]
        %v1444 = vld [vmem:[%s1 + $0x21c] sm:$0xf]
        %v1445 = vld [vmem:[%s1 + $0x220] sm:$0xf]
        %v1446 = vld [vmem:[%s1 + $0x224] sm:$0xf]
        %v1447 = vld [vmem:[%s1 + $0x228] sm:$0xf]
        %v1448 = vld [vmem:[%s1 + $0x22c] sm:$0xf]
        %v1449 = vld [vmem:[%s1 + $0x230] sm:$0xf]
        %v1450 = vld [vmem:[%s1 + $0x234] sm:$0xf]
        %v1451 = vld [vmem:[%s1 + $0x238] sm:$0xf]
        %v1452 = vld [vmem:[%s1 + $0x23c] sm:$0xf]
        %v1597 = vunpack.c.l.b16 %v1309
        %v1598 = vunpack.c.l.b16 %v1310
        %v1599 = vunpack.c.l.b16 %v1311
        %v1600 = vunpack.c.l.b16 %v1312
        %v1601 = vunpack.c.l.b16 %v1313
        %v1602 = vunpack.c.l.b16 %v1314
        %v1603 = vunpack.c.l.b16 %v1315
        %v1604 = vunpack.c.l.b16 %v1316
        %v1605 = vunpack.c.l.b16 %v1317
        %v1606 = vunpack.c.l.b16 %v1318
        %v1607 = vunpack.c.l.b16 %v1319
        %v1608 = vunpack.c.l.b16 %v1320
        %v1609 = vunpack.c.l.b16 %v1321
        %v1610 = vunpack.c.l.b16 %v1322
        %v1611 = vunpack.c.l.b16 %v1323
        %v1612 = vunpack.c.l.b16 %v1324
        %v1613 = vunpack.c.l.b16 %v1325
        %v1614 = vunpack.c.l.b16 %v1326
        %v1615 = vunpack.c.l.b16 %v1327
        %v1616 = vunpack.c.l.b16 %v1328
        %v1617 = vunpack.c.l.b16 %v1329
        %v1618 = vunpack.c.l.b16 %v1330
        %v1619 = vunpack.c.l.b16 %v1331
        %v1620 = vunpack.c.l.b16 %v1332
        %v1621 = vunpack.c.l.b16 %v1333
        %v1622 = vunpack.c.l.b16 %v1334
        %v1623 = vunpack.c.l.b16 %v1335
        %v1624 = vunpack.c.l.b16 %v1336
        %v1625 = vunpack.c.l.b16 %v1337
        %v1626 = vunpack.c.l.b16 %v1338
        %v1627 = vunpack.c.l.b16 %v1339
        %v1628 = vunpack.c.l.b16 %v1340
        %v1629 = vunpack.c.l.b16 %v1341
        %v1630 = vunpack.c.l.b16 %v1342
        %v1631 = vunpack.c.l.b16 %v1343
        %v1632 = vunpack.c.l.b16 %v1344
        %v1633 = vunpack.c.l.b16 %v1345
        %v1634 = vunpack.c.l.b16 %v1346
        %v1635 = vunpack.c.l.b16 %v1347
        %v1636 = vunpack.c.l.b16 %v1348
        %v1637 = vunpack.c.l.b16 %v1349
        %v1638 = vunpack.c.l.b16 %v1350
        %v1639 = vunpack.c.l.b16 %v1351
        %v1640 = vunpack.c.l.b16 %v1352
        %v1641 = vunpack.c.l.b16 %v1353
        %v1642 = vunpack.c.l.b16 %v1354
        %v1643 = vunpack.c.l.b16 %v1355
        %v1644 = vunpack.c.l.b16 %v1356
        %v1645 = vunpack.c.l.b16 %v1357
        %v1646 = vunpack.c.l.b16 %v1358
        %v1647 = vunpack.c.l.b16 %v1359
        %v1648 = vunpack.c.l.b16 %v1360
        %v1649 = vunpack.c.l.b16 %v1361
        %v1650 = vunpack.c.l.b16 %v1362
        %v1651 = vunpack.c.l.b16 %v1363
        %v1652 = vunpack.c.l.b16 %v1364
        %v1653 = vunpack.c.l.b16 %v1365
        %v1654 = vunpack.c.l.b16 %v1366
        %v1655 = vunpack.c.l.b16 %v1367
        %v1656 = vunpack.c.l.b16 %v1368
        %v1657 = vunpack.c.l.b16 %v1369
        %v1658 = vunpack.c.l.b16 %v1370
        %v1659 = vunpack.c.l.b16 %v1371
        %v1660 = vunpack.c.l.b16 %v1372
        %v1661 = vunpack.c.l.b16 %v1373
        %v1662 = vunpack.c.l.b16 %v1374
        %v1663 = vunpack.c.l.b16 %v1375
        %v1664 = vunpack.c.l.b16 %v1376
        %v1665 = vunpack.c.l.b16 %v1377
        %v1666 = vunpack.c.l.b16 %v1378
        %v1667 = vunpack.c.l.b16 %v1379
        %v1668 = vunpack.c.l.b16 %v1380
        %v1669 = vunpack.c.l.b16 %v1381
        %v1670 = vunpack.c.l.b16 %v1382
        %v1671 = vunpack.c.l.b16 %v1383
        %v1672 = vunpack.c.l.b16 %v1384
        %v1673 = vunpack.c.l.b16 %v1385
        %v1674 = vunpack.c.l.b16 %v1386
        %v1675 = vunpack.c.l.b16 %v1387
        %v1676 = vunpack.c.l.b16 %v1388
        %v1677 = vunpack.c.l.b16 %v1389
        %v1678 = vunpack.c.l.b16 %v1390
        %v1679 = vunpack.c.l.b16 %v1391
        %v1680 = vunpack.c.l.b16 %v1392
        %v1681 = vunpack.c.l.b16 %v1393
        %v1682 = vunpack.c.l.b16 %v1394
        %v1683 = vunpack.c.l.b16 %v1395
        %v1684 = vunpack.c.l.b16 %v1396
        %v1685 = vunpack.c.l.b16 %v1397
        %v1686 = vunpack.c.l.b16 %v1398
        %v1687 = vunpack.c.l.b16 %v1399
        %v1688 = vunpack.c.l.b16 %v1400
        %v1689 = vunpack.c.l.b16 %v1401
        %v1690 = vunpack.c.l.b16 %v1402
        %v1691 = vunpack.c.l.b16 %v1403
        %v1692 = vunpack.c.l.b16 %v1404
        %v1693 = vunpack.c.l.b16 %v1405
        %v1694 = vunpack.c.l.b16 %v1406
        %v1695 = vunpack.c.l.b16 %v1407
        %v1696 = vunpack.c.l.b16 %v1408
        %v1697 = vunpack.c.l.b16 %v1409
        %v1698 = vunpack.c.l.b16 %v1410
        %v1699 = vunpack.c.l.b16 %v1411
        %v1700 = vunpack.c.l.b16 %v1412
        %v1701 = vunpack.c.l.b16 %v1413
        %v1702 = vunpack.c.l.b16 %v1414
        %v1703 = vunpack.c.l.b16 %v1415
        %v1704 = vunpack.c.l.b16 %v1416
        %v1705 = vunpack.c.l.b16 %v1417
        %v1706 = vunpack.c.l.b16 %v1418
        %v1707 = vunpack.c.l.b16 %v1419
        %v1708 = vunpack.c.l.b16 %v1420
        %v1709 = vunpack.c.l.b16 %v1421
        %v1710 = vunpack.c.l.b16 %v1422
        %v1711 = vunpack.c.l.b16 %v1423
        %v1712 = vunpack.c.l.b16 %v1424
        %v1713 = vunpack.c.l.b16 %v1425
        %v1714 = vunpack.c.l.b16 %v1426
        %v1715 = vunpack.c.l.b16 %v1427
        %v1716 = vunpack.c.l.b16 %v1428
        %v1717 = vunpack.c.l.b16 %v1429
        %v1718 = vunpack.c.l.b16 %v1430
        %v1719 = vunpack.c.l.b16 %v1431
        %v1720 = vunpack.c.l.b16 %v1432
        %v1721 = vunpack.c.l.b16 %v1433
        %v1722 = vunpack.c.l.b16 %v1434
        %v1723 = vunpack.c.l.b16 %v1435
        %v1724 = vunpack.c.l.b16 %v1436
        %v1725 = vunpack.c.l.b16 %v1437
        %v1726 = vunpack.c.l.b16 %v1438
        %v1727 = vunpack.c.l.b16 %v1439
        %v1728 = vunpack.c.l.b16 %v1440
        %v1729 = vunpack.c.l.b16 %v1441
        %v1730 = vunpack.c.l.b16 %v1442
        %v1731 = vunpack.c.l.b16 %v1443
        %v1732 = vunpack.c.l.b16 %v1444
        %v1733 = vunpack.c.l.b16 %v1445
        %v1734 = vunpack.c.l.b16 %v1446
        %v1735 = vunpack.c.l.b16 %v1447
        %v1736 = vunpack.c.l.b16 %v1448
        %v1737 = vunpack.c.l.b16 %v1449
        %v1738 = vunpack.c.l.b16 %v1450
        %v1739 = vunpack.c.l.b16 %v1451
        %v1740 = vunpack.c.l.b16 %v1452
        %v1741 = vpack.c.b16 %v1598, %v1597
        %v1742 = vpack.c.b16 %v1600, %v1599
        %v1743 = vpack.c.b16 %v1602, %v1601
        %v1744 = vpack.c.b16 %v1604, %v1603
        %v1745 = vpack.c.b16 %v1606, %v1605
        %v1746 = vpack.c.b16 %v1608, %v1607
        %v1747 = vpack.c.b16 %v1610, %v1609
        %v1748 = vpack.c.b16 %v1612, %v1611
        %v1749 = vpack.c.b16 %v1614, %v1613
        %v1750 = vpack.c.b16 %v1616, %v1615
        %v1751 = vpack.c.b16 %v1618, %v1617
        %v1752 = vpack.c.b16 %v1620, %v1619
        %v1753 = vpack.c.b16 %v1622, %v1621
        %v1754 = vpack.c.b16 %v1624, %v1623
        %v1755 = vpack.c.b16 %v1626, %v1625
        %v1756 = vpack.c.b16 %v1628, %v1627
        %v1757 = vpack.c.b16 %v1630, %v1629
        %v1758 = vpack.c.b16 %v1632, %v1631
        %v1759 = vpack.c.b16 %v1634, %v1633
        %v1760 = vpack.c.b16 %v1636, %v1635
        %v1761 = vpack.c.b16 %v1638, %v1637
        %v1762 = vpack.c.b16 %v1640, %v1639
        %v1763 = vpack.c.b16 %v1642, %v1641
        %v1764 = vpack.c.b16 %v1644, %v1643
        %v1765 = vpack.c.b16 %v1646, %v1645
        %v1766 = vpack.c.b16 %v1648, %v1647
        %v1767 = vpack.c.b16 %v1650, %v1649
        %v1768 = vpack.c.b16 %v1652, %v1651
        %v1769 = vpack.c.b16 %v1654, %v1653
        %v1770 = vpack.c.b16 %v1656, %v1655
        %v1771 = vpack.c.b16 %v1658, %v1657
        %v1772 = vpack.c.b16 %v1660, %v1659
        %v1773 = vpack.c.b16 %v1662, %v1661
        %v1774 = vpack.c.b16 %v1664, %v1663
        %v1775 = vpack.c.b16 %v1666, %v1665
        %v1776 = vpack.c.b16 %v1668, %v1667
        %v1777 = vpack.c.b16 %v1670, %v1669
        %v1778 = vpack.c.b16 %v1672, %v1671
        %v1779 = vpack.c.b16 %v1674, %v1673
        %v1780 = vpack.c.b16 %v1676, %v1675
        %v1781 = vpack.c.b16 %v1678, %v1677
        %v1782 = vpack.c.b16 %v1680, %v1679
        %v1783 = vpack.c.b16 %v1682, %v1681
        %v1784 = vpack.c.b16 %v1684, %v1683
        %v1785 = vpack.c.b16 %v1686, %v1685
        %v1786 = vpack.c.b16 %v1688, %v1687
        %v1787 = vpack.c.b16 %v1690, %v1689
        %v1788 = vpack.c.b16 %v1692, %v1691
        %v1789 = vpack.c.b16 %v1694, %v1693
        %v1790 = vpack.c.b16 %v1696, %v1695
        %v1791 = vpack.c.b16 %v1698, %v1697
        %v1792 = vpack.c.b16 %v1700, %v1699
        %v1793 = vpack.c.b16 %v1702, %v1701
        %v1794 = vpack.c.b16 %v1704, %v1703
        %v1795 = vpack.c.b16 %v1706, %v1705
        %v1796 = vpack.c.b16 %v1708, %v1707
        %v1797 = vpack.c.b16 %v1710, %v1709
        %v1798 = vpack.c.b16 %v1712, %v1711
        %v1799 = vpack.c.b16 %v1714, %v1713
        %v1800 = vpack.c.b16 %v1716, %v1715
        %v1801 = vpack.c.b16 %v1718, %v1717
        %v1802 = vpack.c.b16 %v1720, %v1719
        %v1803 = vpack.c.b16 %v1722, %v1721
        %v1804 = vpack.c.b16 %v1724, %v1723
        %v1805 = vpack.c.b16 %v1726, %v1725
        %v1806 = vpack.c.b16 %v1728, %v1727
        %v1807 = vpack.c.b16 %v1730, %v1729
        %v1808 = vpack.c.b16 %v1732, %v1731
        %v1809 = vpack.c.b16 %v1734, %v1733
        %v1810 = vpack.c.b16 %v1736, %v1735
        %v1811 = vpack.c.b16 %v1738, %v1737
        %v1812 = vpack.c.b16 %v1740, %v1739
        %1885 = vmatprep.subr.bf16.mxu0 0
        %1886 = vmatpush1.bf16.msra.mxu0 %v1741
        %1887 = vmatprep.subr.bf16.mxu0 0
        %1888 = vmatpush1.bf16.msra.mxu0 %v1742
        %1889 = vmatprep.subr.bf16.mxu0 0
        %1890 = vmatpush1.bf16.msra.mxu0 %v1743
        %1891 = vmatprep.subr.bf16.mxu0 0
        %1892 = vmatpush1.bf16.msra.mxu0 %v1744
        %1893 = vmatprep.subr.bf16.mxu0 0
        %1894 = vmatpush1.bf16.msra.mxu0 %v1745
        %1895 = vmatprep.subr.bf16.mxu0 0
        %1896 = vmatpush1.bf16.msra.mxu0 %v1746
        %1897 = vmatprep.subr.bf16.mxu0 0
        %1898 = vmatpush1.bf16.msra.mxu0 %v1747
        %1899 = vmatprep.subr.bf16.mxu0 0
        %1900 = vmatpush1.bf16.msra.mxu0 %v1748
        %1901 = vmatprep.subr.bf16.mxu0 0
        %1902 = vmatpush1.bf16.msra.mxu0 %v1749
        %1903 = vmatprep.subr.bf16.mxu0 0
        %1904 = vmatpush1.bf16.msra.mxu0 %v1750
        %1905 = vmatprep.subr.bf16.mxu0 0
        %1906 = vmatpush1.bf16.msra.mxu0 %v1751
        %1907 = vmatprep.subr.bf16.mxu0 0
        %1908 = vmatpush1.bf16.msra.mxu0 %v1752
        %1909 = vmatprep.subr.bf16.mxu0 0
        %1910 = vmatpush1.bf16.msra.mxu0 %v1753
        %1911 = vmatprep.subr.bf16.mxu0 0
        %1912 = vmatpush1.bf16.msra.mxu0 %v1754
        %1913 = vmatprep.subr.bf16.mxu0 0
        %1914 = vmatpush1.bf16.msra.mxu0 %v1755
        %1915 = vmatprep.subr.bf16.mxu0 0
        %1916 = vmatpush1.bf16.msra.mxu0 %v1756
        %1917 = vmatprep.mubr.bf16.mxu0 %v1274
        %1918 = vmatmul.mubr.bf16.gmra.mrb[0].mxu0 %v1273
        %v1919 = vpop.f32.mrb[0].mxu0
        %v1920 = vadd.f32 0.0, %v1919
        %v1921 = vpop.f32.mrb[0].mxu0
        %v1922 = vpop.f32.mrb[0].mxu0
        %v1923 = vadd.f32 0.0, %v1922
        %v1924 = vpop.f32.mrb[0].mxu0
        %1925 = vmatprep.mubr.bf16.mxu0 %v1283
        %1926 = vmatmul.mubr.bf16.gmra.mrb[0].mxu0 %v1282
        %v1927 = vpop.f32.mrb[0].mxu0
        %v1928 = vadd.f32 0.0, %v1927
        %v1929 = vpop.f32.mrb[0].mxu0
        %v1930 = vpop.f32.mrb[0].mxu0
        %v1931 = vadd.f32 0.0, %v1930
        %v1932 = vpop.f32.mrb[0].mxu0
        %1933 = vmatprep.mubr.bf16.mxu0 %v1292
        %1934 = vmatmul.mubr.bf16.gmra.mrb[0].mxu0 %v1291
        %v1935 = vpop.f32.mrb[0].mxu0
        %v1936 = vadd.f32 0.0, %v1935
        %v1937 = vpop.f32.mrb[0].mxu0
        %v1938 = vpop.f32.mrb[0].mxu0
        %v1939 = vadd.f32 0.0, %v1938
        %v1940 = vpop.f32.mrb[0].mxu0
        %1941 = vmatprep.mubr.bf16.mxu0 %v1301
        %1942 = vmatmul.mubr.bf16.gmra.mrb[0].mxu0 %v1300
        %v1943 = vpop.f32.mrb[0].mxu0
        %v1944 = vadd.f32 0.0, %v1943
        %v1945 = vpop.f32.mrb[0].mxu0
        %v1946 = vpop.f32.mrb[0].mxu0
        %v1947 = vadd.f32 0.0, %v1946
        %v1948 = vpop.f32.mrb[0].mxu0
        %1949 = vdwg.mxu0
        %1950 = vmatprep.subr.bf16.mxu0 0
        %1951 = vmatpush1.bf16.msra.mxu0 %v1757
        %1952 = vmatprep.subr.bf16.mxu0 0
        %1953 = vmatpush1.bf16.msra.mxu0 %v1758
        %1954 = vmatprep.subr.bf16.mxu0 0
        %1955 = vmatpush1.bf16.msra.mxu0 %v1759
        %1956 = vmatprep.subr.bf16.mxu0 0
        %1957 = vmatpush1.bf16.msra.mxu0 %v1760
        %1958 = vmatprep.subr.bf16.mxu0 0
        %1959 = vmatpush1.bf16.msra.mxu0 %v1761
        %1960 = vmatprep.subr.bf16.mxu0 0
        %1961 = vmatpush1.bf16.msra.mxu0 %v1762
        %1962 = vmatprep.subr.bf16.mxu0 0
        %1963 = vmatpush1.bf16.msra.mxu0 %v1763
        %1964 = vmatprep.subr.bf16.mxu0 0
        %1965 = vmatpush1.bf16.msra.mxu0 %v1764
        %1966 = vmatprep.subr.bf16.mxu0 0
        %1967 = vmatpush1.bf16.msra.mxu0 %v1765
        %1968 = vmatprep.subr.bf16.mxu0 0
        %1969 = vmatpush1.bf16.msra.mxu0 %v1766
        %1970 = vmatprep.subr.bf16.mxu0 0
        %1971 = vmatpush1.bf16.msra.mxu0 %v1767
        %1972 = vmatprep.subr.bf16.mxu0 0
        %1973 = vmatpush1.bf16.msra.mxu0 %v1768
        %1974 = vmatprep.subr.bf16.mxu0 0
        %1975 = vmatpush1.bf16.msra.mxu0 %v1769
        %1976 = vmatprep.subr.bf16.mxu0 0
        %1977 = vmatpush1.bf16.msra.mxu0 %v1770
        %1978 = vmatprep.subr.bf16.mxu0 0
        %1979 = vmatpush1.bf16.msra.mxu0 %v1771
        %1980 = vmatprep.subr.bf16.mxu0 0
        %1981 = vmatpush1.bf16.msra.mxu0 %v1772
        %1982 = vmatprep.mubr.bf16.mxu0 %v1276
        %1983 = vmatmul.mubr.bf16.gmra.mrb[0].mxu0 %v1275
        %v1984 = vpop.f32.mrb[0].mxu0
        %v1985 = vadd.f32 %v1920, %v1984
        %v1986 = vpop.f32.mrb[0].mxu0
        %v1987 = vpop.f32.mrb[0].mxu0
        %v1988 = vadd.f32 %v1923, %v1987
        %v1989 = vpop.f32.mrb[0].mxu0
        %1990 = vmatprep.mubr.bf16.mxu0 %v1285
        %1991 = vmatmul.mubr.bf16.gmra.mrb[0].mxu0 %v1284
        %v1992 = vpop.f32.mrb[0].mxu0
        %v1993 = vadd.f32 %v1928, %v1992
        %v1994 = vpop.f32.mrb[0].mxu0
        %v1995 = vpop.f32.mrb[0].mxu0
        %v1996 = vadd.f32 %v1931, %v1995
        %v1997 = vpop.f32.mrb[0].mxu0
        %1998 = vmatprep.mubr.bf16.mxu0 %v1294
        %1999 = vmatmul.mubr.bf16.gmra.mrb[0].mxu0 %v1293
        %v2000 = vpop.f32.mrb[0].mxu0
        %v2001 = vadd.f32 %v1936, %v2000
        %v2002 = vpop.f32.mrb[0].mxu0
        %v2003 = vpop.f32.mrb[0].mxu0
        %v2004 = vadd.f32 %v1939, %v2003
        %v2005 = vpop.f32.mrb[0].mxu0
        %2006 = vmatprep.mubr.bf16.mxu0 %v1303
        %2007 = vmatmul.mubr.bf16.gmra.mrb[0].mxu0 %v1302
        %v2008 = vpop.f32.mrb[0].mxu0
        %v2009 = vadd.f32 %v1944, %v2008
        %v2010 = vpop.f32.mrb[0].mxu0
        %v2011 = vpop.f32.mrb[0].mxu0
        %v2012 = vadd.f32 %v1947, %v2011
        %v2013 = vpop.f32.mrb[0].mxu0
        %2014 = vdwg.mxu0
        %2015 = vmatprep.subr.bf16.mxu0 0
        %2016 = vmatpush1.bf16.msra.mxu0 %v1773
        %2017 = vmatprep.subr.bf16.mxu0 0
        %2018 = vmatpush1.bf16.msra.mxu0 %v1774
        %2019 = vmatprep.subr.bf16.mxu0 0
        %2020 = vmatpush1.bf16.msra.mxu0 %v1775
        %2021 = vmatprep.subr.bf16.mxu0 0
        %2022 = vmatpush1.bf16.msra.mxu0 %v1776
        %2023 = vmatprep.subr.bf16.mxu0 0
        %2024 = vmatpush1.bf16.msra.mxu0 %v1777
        %2025 = vmatprep.subr.bf16.mxu0 0
        %2026 = vmatpush1.bf16.msra.mxu0 %v1778
        %2027 = vmatprep.subr.bf16.mxu0 0
        %2028 = vmatpush1.bf16.msra.mxu0 %v1779
        %2029 = vmatprep.subr.bf16.mxu0 0
        %2030 = vmatpush1.bf16.msra.mxu0 %v1780
        %2031 = vmatprep.subr.bf16.mxu0 0
        %2032 = vmatpush1.bf16.msra.mxu0 %v1781
        %2033 = vmatprep.subr.bf16.mxu0 0
        %2034 = vmatpush1.bf16.msra.mxu0 %v1782
        %2035 = vmatprep.subr.bf16.mxu0 0
        %2036 = vmatpush1.bf16.msra.mxu0 %v1783
        %2037 = vmatprep.subr.bf16.mxu0 0
        %2038 = vmatpush1.bf16.msra.mxu0 %v1784
        %2039 = vmatprep.subr.bf16.mxu0 0
        %2040 = vmatpush1.bf16.msra.mxu0 %v1785
        %2041 = vmatprep.subr.bf16.mxu0 0
        %2042 = vmatpush1.bf16.msra.mxu0 %v1786
        %2043 = vmatprep.subr.bf16.mxu0 0
        %2044 = vmatpush1.bf16.msra.mxu0 %v1787
        %2045 = vmatprep.subr.bf16.mxu0 0
        %2046 = vmatpush1.bf16.msra.mxu0 %v1788
        %2047 = vmatprep.mubr.bf16.mxu0 %v1278
        %2048 = vmatmul.mubr.bf16.gmra.mrb[0].mxu0 %v1277
        %v2049 = vpop.f32.mrb[0].mxu0
        %v2050 = vadd.f32 %v1985, %v2049
        %v2051 = vpop.f32.mrb[0].mxu0
        %v2052 = vpop.f32.mrb[0].mxu0
        %v2053 = vadd.f32 %v1988, %v2052
        %v2054 = vpop.f32.mrb[0].mxu0
        %2055 = vmatprep.mubr.bf16.mxu0 %v1287
        %2056 = vmatmul.mubr.bf16.gmra.mrb[0].mxu0 %v1286
        %v2057 = vpop.f32.mrb[0].mxu0
        %v2058 = vadd.f32 %v1993, %v2057
        %v2059 = vpop.f32.mrb[0].mxu0
        %v2060 = vpop.f32.mrb[0].mxu0
        %v2061 = vadd.f32 %v1996, %v2060
        %v2062 = vpop.f32.mrb[0].mxu0
        %2063 = vmatprep.mubr.bf16.mxu0 %v1296
        %2064 = vmatmul.mubr.bf16.gmra.mrb[0].mxu0 %v1295
        %v2065 = vpop.f32.mrb[0].mxu0
        %v2066 = vadd.f32 %v2001, %v2065
        %v2067 = vpop.f32.mrb[0].mxu0
        %v2068 = vpop.f32.mrb[0].mxu0
        %v2069 = vadd.f32 %v2004, %v2068
        %v2070 = vpop.f32.mrb[0].mxu0
        %2071 = vmatprep.mubr.bf16.mxu0 %v1305
        %2072 = vmatmul.mubr.bf16.gmra.mrb[0].mxu0 %v1304
        %v2073 = vpop.f32.mrb[0].mxu0
        %v2074 = vadd.f32 %v2009, %v2073
        %v2075 = vpop.f32.mrb[0].mxu0
        %v2076 = vpop.f32.mrb[0].mxu0
        %v2077 = vadd.f32 %v2012, %v2076
        %v2078 = vpop.f32.mrb[0].mxu0
        %2079 = vdwg.mxu0
        %2080 = vmatprep.subr.bf16.mxu0 0
        %2081 = vmatpush1.bf16.msra.mxu0 %v1789
        %2082 = vmatprep.subr.bf16.mxu0 0
        %2083 = vmatpush1.bf16.msra.mxu0 %v1790
        %2084 = vmatprep.subr.bf16.mxu0 0
        %2085 = vmatpush1.bf16.msra.mxu0 %v1791
        %2086 = vmatprep.subr.bf16.mxu0 0
        %2087 = vmatpush1.bf16.msra.mxu0 %v1792
        %2088 = vmatprep.subr.bf16.mxu0 0
        %2089 = vmatpush1.bf16.msra.mxu0 %v1793
        %2090 = vmatprep.subr.bf16.mxu0 0
        %2091 = vmatpush1.bf16.msra.mxu0 %v1794
        %2092 = vmatprep.subr.bf16.mxu0 0
        %2093 = vmatpush1.bf16.msra.mxu0 %v1795
        %2094 = vmatprep.subr.bf16.mxu0 0
        %2095 = vmatpush1.bf16.msra.mxu0 %v1796
        %2096 = vmatprep.subr.bf16.mxu0 0
        %2097 = vmatpush1.bf16.msra.mxu0 %v1797
        %2098 = vmatprep.subr.bf16.mxu0 0
        %2099 = vmatpush1.bf16.msra.mxu0 %v1798
        %2100 = vmatprep.subr.bf16.mxu0 0
        %2101 = vmatpush1.bf16.msra.mxu0 %v1799
        %2102 = vmatprep.subr.bf16.mxu0 0
        %2103 = vmatpush1.bf16.msra.mxu0 %v1800
        %2104 = vmatprep.subr.bf16.mxu0 0
        %2105 = vmatpush1.bf16.msra.mxu0 %v1801
        %2106 = vmatprep.subr.bf16.mxu0 0
        %2107 = vmatpush1.bf16.msra.mxu0 %v1802
        %2108 = vmatprep.subr.bf16.mxu0 0
        %2109 = vmatpush1.bf16.msra.mxu0 %v1803
        %2110 = vmatprep.subr.bf16.mxu0 0
        %2111 = vmatpush1.bf16.msra.mxu0 %v1804
        %2112 = vmatprep.mubr.bf16.mxu0 %v1280
        %2113 = vmatmul.mubr.bf16.gmra.mrb[0].mxu0 %v1279
        %v2114 = vpop.f32.mrb[0].mxu0
        %v2115 = vadd.f32 %v2050, %v2114
        %v2116 = vpop.f32.mrb[0].mxu0
        %v2117 = vpop.f32.mrb[0].mxu0
        %v2118 = vadd.f32 %v2053, %v2117
        %v2119 = vpop.f32.mrb[0].mxu0
        %2120 = vmatprep.mubr.bf16.mxu0 %v1289
        %2121 = vmatmul.mubr.bf16.gmra.mrb[0].mxu0 %v1288
        %v2122 = vpop.f32.mrb[0].mxu0
        %v2123 = vadd.f32 %v2058, %v2122
        %v2124 = vpop.f32.mrb[0].mxu0
        %v2125 = vpop.f32.mrb[0].mxu0
        %v2126 = vadd.f32 %v2061, %v2125
        %v2127 = vpop.f32.mrb[0].mxu0
        %2128 = vmatprep.mubr.bf16.mxu0 %v1298
        %2129 = vmatmul.mubr.bf16.gmra.mrb[0].mxu0 %v1297
        %v2130 = vpop.f32.mrb[0].mxu0
        %v2131 = vadd.f32 %v2066, %v2130
        %v2132 = vpop.f32.mrb[0].mxu0
        %v2133 = vpop.f32.mrb[0].mxu0
        %v2134 = vadd.f32 %v2069, %v2133
        %v2135 = vpop.f32.mrb[0].mxu0
        %2136 = vmatprep.mubr.bf16.mxu0 %v1307
        %2137 = vmatmul.mubr.bf16.gmra.mrb[0].mxu0 %v1306
        %v2138 = vpop.f32.mrb[0].mxu0
        %v2139 = vadd.f32 %v2074, %v2138
        %v2140 = vpop.f32.mrb[0].mxu0
        %v2141 = vpop.f32.mrb[0].mxu0
        %v2142 = vadd.f32 %v2077, %v2141
        %v2143 = vpop.f32.mrb[0].mxu0
        %2144 = vdwg.mxu0
        %2145 = vmatprep.subr.bf16.mxu0 0
        %2146 = vmatpush1.bf16.msra.mxu0 %v1805
        %2147 = vmatprep.subr.bf16.mxu0 0
        %2148 = vmatpush1.bf16.msra.mxu0 %v1806
        %2149 = vmatprep.subr.bf16.mxu0 0
        %2150 = vmatpush1.bf16.msra.mxu0 %v1807
        %2151 = vmatprep.subr.bf16.mxu0 0
        %2152 = vmatpush1.bf16.msra.mxu0 %v1808
        %2153 = vmatprep.subr.bf16.mxu0 0
        %2154 = vmatpush1.bf16.msra.mxu0 %v1809
        %2155 = vmatprep.subr.bf16.mxu0 0
        %2156 = vmatpush1.bf16.msra.mxu0 %v1810
        %2157 = vmatprep.subr.bf16.mxu0 0
        %2158 = vmatpush1.bf16.msra.mxu0 %v1811
        %2159 = vmatprep.subr.bf16.mxu0 0
        %2160 = vmatpush1.bf16.msra.mxu0 %v1812
        %2161 = vmatprep.subr.bf16.mxu0 0
        %2162 = vmatpush1.bf16.msra.mxu0 0
        %2163 = vmatprep.subr.bf16.mxu0 0
        %2164 = vmatpush1.bf16.msra.mxu0 0
        %2165 = vmatprep.subr.bf16.mxu0 0
        %2166 = vmatpush1.bf16.msra.mxu0 0
        %2167 = vmatprep.subr.bf16.mxu0 0
        %2168 = vmatpush1.bf16.msra.mxu0 0
        %2169 = vmatprep.subr.bf16.mxu0 0
        %2170 = vmatpush1.bf16.msra.mxu0 0
        %2171 = vmatprep.subr.bf16.mxu0 0
        %2172 = vmatpush1.bf16.msra.mxu0 0
        %2173 = vmatprep.subr.bf16.mxu0 0
        %2174 = vmatpush1.bf16.msra.mxu0 0
        %2175 = vmatprep.subr.bf16.mxu0 0
        %2176 = vmatpush1.bf16.msra.mxu0 0
        %2177 = vmatprep.mubr.bf16.mxu0 0
        %2178 = vmatmul.mubr.bf16.gmra.mrb[0].mxu0 %v1281
        %v2179 = vpop.f32.mrb[0].mxu0
        %v2180 = vadd.f32 %v2115, %v2179
        %v2181 = vpop.f32.mrb[0].mxu0
        %v2182 = vpop.f32.mrb[0].mxu0
        %v2183 = vadd.f32 %v2118, %v2182
        %v2184 = vpop.f32.mrb[0].mxu0
        %2185 = vmatprep.mubr.bf16.mxu0 0
        %2186 = vmatmul.mubr.bf16.gmra.mrb[0].mxu0 %v1290
        %v2187 = vpop.f32.mrb[0].mxu0
        %v2188 = vadd.f32 %v2123, %v2187
        %v2189 = vpop.f32.mrb[0].mxu0
        %v2190 = vpop.f32.mrb[0].mxu0
        %v2191 = vadd.f32 %v2126, %v2190
        %v2192 = vpop.f32.mrb[0].mxu0
        %2193 = vmatprep.mubr.bf16.mxu0 0
        %2194 = vmatmul.mubr.bf16.gmra.mrb[0].mxu0 %v1299
        %v2195 = vpop.f32.mrb[0].mxu0
        %v2196 = vadd.f32 %v2131, %v2195
        %v2197 = vpop.f32.mrb[0].mxu0
        %v2198 = vpop.f32.mrb[0].mxu0
        %v2199 = vadd.f32 %v2134, %v2198
        %v2200 = vpop.f32.mrb[0].mxu0
        %2201 = vmatprep.mubr.bf16.mxu0 0
        %2202 = vmatmul.mubr.bf16.gmra.mrb[0].mxu0 %v1308
        %v2203 = vpop.f32.mrb[0].mxu0
        %v2204 = vadd.f32 %v2139, %v2203
        %v2205 = vpop.f32.mrb[0].mxu0
        %v2206 = vpop.f32.mrb[0].mxu0
        %v2207 = vadd.f32 %v2142, %v2206
        %v2208 = vpop.f32.mrb[0].mxu0
        %2209 = vdwg.mxu0
        %v2210 = vpack.c.bf16 %v2180, %v2180
        %v2211 = vpack.c.bf16 %v2183, %v2183
        %v2212 = vpack.c.bf16 %v2188, %v2188
        %v2213 = vpack.c.bf16 %v2191, %v2191
        %v2214 = vpack.c.bf16 %v2196, %v2196
        %v2215 = vpack.c.bf16 %v2199, %v2199
        %v2216 = vpack.c.bf16 %v2204, %v2204
        %v2217 = vpack.c.bf16 %v2207, %v2207
        %2218 = vst [vmem:[%s582] sm:$0xf] %v2210
        %2219 = vst [vmem:[%s582 + $0x4] sm:$0xf] %v2211
        %2220 = vst [vmem:[%s582 + $0x8] sm:$0xf] %v2212
        %2221 = vst [vmem:[%s582 + $0xc] sm:$0xf] %v2213
        %2222 = vst [vmem:[%s582 + $0x10] sm:$0xf] %v2214
        %2223 = vst [vmem:[%s582 + $0x14] sm:$0xf] %v2215
        %2224 = vst [vmem:[%s582 + $0x18] sm:$0xf] %v2216
        %2225 = vst [vmem:[%s582 + $0x1c] sm:$0xf] %v2217
        %v2226 = vadd.f32 %v2180, %v2183
        %v2227 = vadd.f32 %v2226, %v2188
        %v2228 = vadd.f32 %v2227, %v2191
        %v2229 = vadd.f32 %v2228, %v2196
        %v2230 = vadd.f32 %v2229, %v2199
        %v2231 = vadd.f32 %v2230, %v2204
        %v2232 = vadd.f32 %v2231, %v2207
        %v2233 = vrot.slane %v2232, 4
        %v2234 = vadd.f32 %v2232, %v2233
        %v2235 = vrot.slane %v2234, 2
        %v2236 = vadd.f32 %v2234, %v2235
        %v2237 = vrot.slane %v2236, 1
        %v2238 = vadd.f32 %v2236, %v2237
        %v2239 = vmul.f32 %v2180, %v2180
        %v2240 = vmul.f32 %v2183, %v2183
        %v2241 = vmul.f32 %v2188, %v2188
        %v2242 = vmul.f32 %v2191, %v2191
        %v2243 = vmul.f32 %v2196, %v2196
        %v2244 = vmul.f32 %v2199, %v2199
        %v2245 = vmul.f32 %v2204, %v2204
        %v2246 = vmul.f32 %v2207, %v2207
        %v2247 = vadd.f32 %v2239, %v2240
        %v2248 = vadd.f32 %v2247, %v2241
        %v2249 = vadd.f32 %v2248, %v2242
        %v2250 = vadd.f32 %v2249, %v2243
        %v2251 = vadd.f32 %v2250, %v2244
        %v2252 = vadd.f32 %v2251, %v2245
        %v2253 = vadd.f32 %v2252, %v2246
        %v2254 = vrot.slane %v2253, 4
        %v2255 = vadd.f32 %v2253, %v2254
        %v2256 = vrot.slane %v2255, 2
        %v2257 = vadd.f32 %v2255, %v2256
        %v2258 = vrot.slane %v2257, 1
        %v2259 = vadd.f32 %v2257, %v2258
        %vm2260 = vcmask 1040384
        %v2261 = vsel %vm2260, %v2238, %v2259
        %2262 = vst [vmem:[%s589] sm:$0x3] %v2261
        %v2263 = vld [vmem:[#allocation2 + $0x20] sm:$0xff]
        %v2264 = vld [vmem:[#allocation2 + $0x68] sm:$0xff]
        %v2265 = vld [vmem:[#allocation2 + $0xb0] sm:$0xff]
        %v2266 = vld [vmem:[#allocation2 + $0xf8] sm:$0xff]
        %v2267 = vld [vmem:[%s2] sm:$0xf]
        %v2268 = vld [vmem:[%s2 + $0x4] sm:$0xf]
        %v2269 = vld [vmem:[%s2 + $0x8] sm:$0xf]
        %v2270 = vld [vmem:[%s2 + $0xc] sm:$0xf]
        %v2271 = vld [vmem:[%s2 + $0x10] sm:$0xf]
        %v2272 = vld [vmem:[%s2 + $0x14] sm:$0xf]
        %v2273 = vld [vmem:[%s2 + $0x18] sm:$0xf]
        %v2274 = vld [vmem:[%s2 + $0x1c] sm:$0xf]
        %v2275 = vld [vmem:[%s2 + $0x20] sm:$0xf]
        %v2276 = vld [vmem:[%s2 + $0x24] sm:$0xf]
        %v2277 = vld [vmem:[%s2 + $0x28] sm:$0xf]
        %v2278 = vld [vmem:[%s2 + $0x2c] sm:$0xf]
        %v2279 = vld [vmem:[%s2 + $0x30] sm:$0xf]
        %v2280 = vld [vmem:[%s2 + $0x34] sm:$0xf]
        %v2281 = vld [vmem:[%s2 + $0x38] sm:$0xf]
        %v2282 = vld [vmem:[%s2 + $0x3c] sm:$0xf]
        %v2299 = vunpack.c.l.b16 %v2267
        %v2300 = vunpack.c.l.b16 %v2268
        %v2301 = vunpack.c.l.b16 %v2269
        %v2302 = vunpack.c.l.b16 %v2270
        %v2303 = vunpack.c.l.b16 %v2271
        %v2304 = vunpack.c.l.b16 %v2272
        %v2305 = vunpack.c.l.b16 %v2273
        %v2306 = vunpack.c.l.b16 %v2274
        %v2307 = vunpack.c.l.b16 %v2275
        %v2308 = vunpack.c.l.b16 %v2276
        %v2309 = vunpack.c.l.b16 %v2277
        %v2310 = vunpack.c.l.b16 %v2278
        %v2311 = vunpack.c.l.b16 %v2279
        %v2312 = vunpack.c.l.b16 %v2280
        %v2313 = vunpack.c.l.b16 %v2281
        %v2314 = vunpack.c.l.b16 %v2282
        %v2315 = vpack.c.b16 %v2300, %v2299
        %v2316 = vpack.c.b16 %v2302, %v2301
        %v2317 = vpack.c.b16 %v2304, %v2303
        %v2318 = vpack.c.b16 %v2306, %v2305
        %v2319 = vpack.c.b16 %v2308, %v2307
        %v2320 = vpack.c.b16 %v2310, %v2309
        %v2321 = vpack.c.b16 %v2312, %v2311
        %v2322 = vpack.c.b16 %v2314, %v2313
        %2331 = vmatprep.subr.bf16.mxu0 0
        %2332 = vmatpush1.bf16.msra.mxu0 %v2315
        %2333 = vmatprep.subr.bf16.mxu0 0
        %2334 = vmatpush1.bf16.msra.mxu0 %v2316
        %2335 = vmatprep.subr.bf16.mxu0 0
        %2336 = vmatpush1.bf16.msra.mxu0 %v2317
        %2337 = vmatprep.subr.bf16.mxu0 0
        %2338 = vmatpush1.bf16.msra.mxu0 %v2318
        %2339 = vmatprep.subr.bf16.mxu0 0
        %2340 = vmatpush1.bf16.msra.mxu0 %v2319
        %2341 = vmatprep.subr.bf16.mxu0 0
        %2342 = vmatpush1.bf16.msra.mxu0 %v2320
        %2343 = vmatprep.subr.bf16.mxu0 0
        %2344 = vmatpush1.bf16.msra.mxu0 %v2321
        %2345 = vmatprep.subr.bf16.mxu0 0
        %2346 = vmatpush1.bf16.msra.mxu0 %v2322
        %2347 = vmatprep.subr.bf16.mxu0 0
        %2348 = vmatpush1.bf16.msra.mxu0 0
        %2349 = vmatprep.subr.bf16.mxu0 0
        %2350 = vmatpush1.bf16.msra.mxu0 0
        %2351 = vmatprep.subr.bf16.mxu0 0
        %2352 = vmatpush1.bf16.msra.mxu0 0
        %2353 = vmatprep.subr.bf16.mxu0 0
        %2354 = vmatpush1.bf16.msra.mxu0 0
        %2355 = vmatprep.subr.bf16.mxu0 0
        %2356 = vmatpush1.bf16.msra.mxu0 0
        %2357 = vmatprep.subr.bf16.mxu0 0
        %2358 = vmatpush1.bf16.msra.mxu0 0
        %2359 = vmatprep.subr.bf16.mxu0 0
        %2360 = vmatpush1.bf16.msra.mxu0 0
        %2361 = vmatprep.subr.bf16.mxu0 0
        %2362 = vmatpush1.bf16.msra.mxu0 0
        %2363 = vmatprep.mubr.bf16.mxu0 0
        %2364 = vmatmul.mubr.bf16.gmra.mrb[0].mxu0 %v2263
        %v2365 = vpop.f32.mrb[0].mxu0
        %v2366 = vadd.f32 0.0, %v2365
        %v2367 = vpop.f32.mrb[0].mxu0
        %v2368 = vpop.f32.mrb[0].mxu0
        %v2369 = vadd.f32 0.0, %v2368
        %v2370 = vpop.f32.mrb[0].mxu0
        %2371 = vmatprep.mubr.bf16.mxu0 0
        %2372 = vmatmul.mubr.bf16.gmra.mrb[0].mxu0 %v2264
        %v2373 = vpop.f32.mrb[0].mxu0
        %v2374 = vadd.f32 0.0, %v2373
        %v2375 = vpop.f32.mrb[0].mxu0
        %v2376 = vpop.f32.mrb[0].mxu0
        %v2377 = vadd.f32 0.0, %v2376
        %v2378 = vpop.f32.mrb[0].mxu0
        %2379 = vmatprep.mubr.bf16.mxu0 0
        %2380 = vmatmul.mubr.bf16.gmra.mrb[0].mxu0 %v2265
        %v2381 = vpop.f32.mrb[0].mxu0
        %v2382 = vadd.f32 0.0, %v2381
        %v2383 = vpop.f32.mrb[0].mxu0
        %v2384 = vpop.f32.mrb[0].mxu0
        %v2385 = vadd.f32 0.0, %v2384
        %v2386 = vpop.f32.mrb[0].mxu0
        %2387 = vmatprep.mubr.bf16.mxu0 0
        %2388 = vmatmul.mubr.bf16.gmra.mrb[0].mxu0 %v2266
        %v2389 = vpop.f32.mrb[0].mxu0
        %v2390 = vadd.f32 0.0, %v2389
        %v2391 = vpop.f32.mrb[0].mxu0
        %v2392 = vpop.f32.mrb[0].mxu0
        %v2393 = vadd.f32 0.0, %v2392
        %v2394 = vpop.f32.mrb[0].mxu0
        %2395 = vdwg.mxu0
        %v2396 = vpack.c.bf16 %v2366, %v2366
        %v2397 = vpack.c.bf16 %v2369, %v2369
        %v2398 = vpack.c.bf16 %v2374, %v2374
        %v2399 = vpack.c.bf16 %v2377, %v2377
        %v2400 = vpack.c.bf16 %v2382, %v2382
        %v2401 = vpack.c.bf16 %v2385, %v2385
        %v2402 = vpack.c.bf16 %v2390, %v2390
        %v2403 = vpack.c.bf16 %v2393, %v2393
        %2404 = vst [vmem:[%s596] sm:$0xf] %v2396
        %2405 = vst [vmem:[%s596 + $0x4] sm:$0xf] %v2397
        %2406 = vst [vmem:[%s596 + $0x8] sm:$0xf] %v2398
        %2407 = vst [vmem:[%s596 + $0xc] sm:$0xf] %v2399
        %2408 = vst [vmem:[%s596 + $0x10] sm:$0xf] %v2400
        %2409 = vst [vmem:[%s596 + $0x14] sm:$0xf] %v2401
        %2410 = vst [vmem:[%s596 + $0x18] sm:$0xf] %v2402
        %2411 = vst [vmem:[%s596 + $0x1c] sm:$0xf] %v2403
        %v2412 = vadd.f32 %v2366, %v2369
        %v2413 = vadd.f32 %v2412, %v2374
        %v2414 = vadd.f32 %v2413, %v2377
        %v2415 = vadd.f32 %v2414, %v2382
        %v2416 = vadd.f32 %v2415, %v2385
        %v2417 = vadd.f32 %v2416, %v2390
        %v2418 = vadd.f32 %v2417, %v2393
        %v2419 = vrot.slane %v2418, 4
        %v2420 = vadd.f32 %v2418, %v2419
        %v2421 = vrot.slane %v2420, 2
        %v2422 = vadd.f32 %v2420, %v2421
        %v2423 = vrot.slane %v2422, 1
        %v2424 = vadd.f32 %v2422, %v2423
        %v2425 = vmul.f32 %v2366, %v2366
        %v2426 = vmul.f32 %v2369, %v2369
        %v2427 = vmul.f32 %v2374, %v2374
        %v2428 = vmul.f32 %v2377, %v2377
        %v2429 = vmul.f32 %v2382, %v2382
        %v2430 = vmul.f32 %v2385, %v2385
        %v2431 = vmul.f32 %v2390, %v2390
        %v2432 = vmul.f32 %v2393, %v2393
        %v2433 = vadd.f32 %v2425, %v2426
        %v2434 = vadd.f32 %v2433, %v2427
        %v2435 = vadd.f32 %v2434, %v2428
        %v2436 = vadd.f32 %v2435, %v2429
        %v2437 = vadd.f32 %v2436, %v2430
        %v2438 = vadd.f32 %v2437, %v2431
        %v2439 = vadd.f32 %v2438, %v2432
        %v2440 = vrot.slane %v2439, 4
        %v2441 = vadd.f32 %v2439, %v2440
        %v2442 = vrot.slane %v2441, 2
        %v2443 = vadd.f32 %v2441, %v2442
        %v2444 = vrot.slane %v2443, 1
        %v2445 = vadd.f32 %v2443, %v2444
        %v2446 = vsel %vm2260, %v2424, %v2445
        %2447 = vst [vmem:[%s603] sm:$0x3] %v2446
        %s2448 = sand.u32 %s103, 1
        %s2449 = scalar_lea.sflag [#allocation5], %s2448
        %s2450 = sand.u32 %s103, 1
        %s2451 = smul.addr %s2450, 32
        %s2452 = scalar_lea.vmem [#allocation4], %s2451
        %s2453 = sand.u32 %s27, 1
        %s2454 = scalar_lea.sflag [#allocation7], %s2453
        %s2455 = sand.u32 %s129, 1
        %s2456 = smul.addr %s2455, 2
        %s2457 = scalar_lea.vmem [#allocation6], %s2456
        %s2458 = sand.u32 %s27, 1
        %s2459 = scalar_lea.sflag [#allocation7], %s2458
        %s2460 = sand.u32 %s155, 1
        %s2461 = smul.addr %s2460, 32
        %s2462 = scalar_lea.vmem [#allocation8], %s2461
        %s2463 = sand.u32 %s181, 1
        %s2464 = scalar_lea.sflag [#allocation10], %s2463
        %s2465 = sand.u32 %s181, 1
        %s2466 = smul.addr %s2465, 2
        %s2467 = scalar_lea.vmem [#allocation9], %s2466
        // Predicated region
        $region74: #{tpu_custom_call.1} parent=68 // pred_check
          %p2468 = pneg %p113
        $region75: #{tpu_custom_call.1} parent=68 // pred_check_branch
          %2470 = sbr.rel (%p2468) target = $region77
        $region76: #{tpu_custom_call.1} parent=68 // pred_region
          %s2472 = ssub.s32 512, 512
          %2473 = vsyncadd %s2449, %s2472
          %s2474 = smul.addr %s27, 8
          %s2475 = smul.addr %s2474, 64
          %s2476 = scalar_lea.hbm %s3, %s2475
          %s2477 = sshll.u32 %s2452, 4
          %s2478 = int_to_ptr.vmem [resolvable:$true] %s2477
          %2483 = dma.vmem_to_hbm [thread:$0]  %s2478, 512, %s2476, %s2449, 64, 64, 4
        $region77: #{tpu_custom_call.1} parent=68 // pred_fallthru
          _
        // Predicated region
        $region78: #{tpu_custom_call.1} parent=68 // pred_check
          %p2484 = pneg %p139
        $region79: #{tpu_custom_call.1} parent=68 // pred_check_branch
          %2486 = sbr.rel (%p2484) target = $region81
        $region80: #{tpu_custom_call.1} parent=68 // pred_region
          %s2488 = ssub.s32 32, 32
          %2489 = vsyncadd %s2454, %s2488
          %s2490 = smul.addr %s27, 32
          %s2491 = scalar_lea.hbm %s4, %s2490
          %s2493 = sshll.u32 %s2457, 4
          %s2494 = int_to_ptr.vmem [resolvable:$true] %s2493
          %2496 = dma.vmem_to_hbm [thread:$0]  %s2494, 32, %s2491, %s2454
        $region81: #{tpu_custom_call.1} parent=68 // pred_fallthru
          _
        // Predicated region
        $region82: #{tpu_custom_call.1} parent=68 // pred_check
          %p2497 = pneg %p165
        $region83: #{tpu_custom_call.1} parent=68 // pred_check_branch
          %2499 = sbr.rel (%p2497) target = $region85
        $region84: #{tpu_custom_call.1} parent=68 // pred_region
          %s2501 = ssub.s32 512, 512
          %2502 = vsyncadd %s2459, %s2501
          %s2503 = smul.addr %s27, 8
          %s2504 = smul.addr %s2503, 64
          %s2505 = scalar_lea.hbm %s5, %s2504
          %s2506 = sshll.u32 %s2462, 4
          %s2507 = int_to_ptr.vmem [resolvable:$true] %s2506
          %2512 = dma.vmem_to_hbm [thread:$0]  %s2507, 512, %s2505, %s2459, 64, 64, 4
        $region85: #{tpu_custom_call.1} parent=68 // pred_fallthru
          _
        // Predicated region
        $region86: #{tpu_custom_call.1} parent=68 // pred_check
          %p2513 = pneg %p191
        $region87: #{tpu_custom_call.1} parent=68 // pred_check_branch
          %2515 = sbr.rel (%p2513) target = $region89
        $region88: #{tpu_custom_call.1} parent=68 // pred_region
          %s2517 = ssub.s32 32, 32
          %2518 = vsyncadd %s2464, %s2517
          %s2519 = smul.addr %s27, 32
          %s2520 = scalar_lea.hbm %s6, %s2519
          %s2522 = sshll.u32 %s2467, 4
          %s2523 = int_to_ptr.vmem [resolvable:$true] %s2522
          %2525 = dma.vmem_to_hbm [thread:$0]  %s2523, 32, %s2520, %s2464
        $region89: #{tpu_custom_call.1} parent=68 // pred_fallthru
          _
      $region69: #{tpu_custom_call.1} parent=5 // pred_fallthru
        _
      %p2526 = scmp.le.s32.totalorder 2, %s22
      // Predicated region
      $region90: #{tpu_custom_call.1} parent=5 // pred_check
        %p2527 = pneg %p2526
      $region91: #{tpu_custom_call.1} parent=5 // pred_check_branch
        %2529 = sbr.rel (%p2527) target = $region93
      $region92: #{tpu_custom_call.1} parent=5 // pred_region
        %s2530 = ssub.s32 %s22, 2
        // Predicated region
        $region94: #{tpu_custom_call.1} parent=92 // pred_check
          %p2531 = pneg %p119
        $region95: #{tpu_custom_call.1} parent=92 // pred_check_branch
          %2533 = sbr.rel (%p2531) target = $region97
        $region96: #{tpu_custom_call.1} parent=92 // pred_region
          %s2534 = sand.u32 %s104, 1
          %s2535 = scalar_lea.sflag [#allocation5], %s2534
          %s2536 = sand.u32 %s104, 1
          %s2537 = smul.addr %s2536, 32
          %s2538 = scalar_lea.vmem [#allocation4], %s2537
          %2539 = dma.done %s2535, 512
        $region97: #{tpu_custom_call.1} parent=92 // pred_fallthru
          _
        // Predicated region
        $region98: #{tpu_custom_call.1} parent=92 // pred_check
          %p2540 = pneg %p145
        $region99: #{tpu_custom_call.1} parent=92 // pred_check_branch
          %2542 = sbr.rel (%p2540) target = $region101
        $region100: #{tpu_custom_call.1} parent=92 // pred_region
          %s2543 = sand.u32 %s28, 1
          %s2544 = scalar_lea.sflag [#allocation7], %s2543
          %s2545 = sand.u32 %s130, 1
          %s2546 = smul.addr %s2545, 2
          %s2547 = scalar_lea.vmem [#allocation6], %s2546
          %2548 = dma.done %s2544, 32
        $region101: #{tpu_custom_call.1} parent=92 // pred_fallthru
          _
        // Predicated region
        $region102: #{tpu_custom_call.1} parent=92 // pred_check
          %p2549 = pneg %p171
        $region103: #{tpu_custom_call.1} parent=92 // pred_check_branch
          %2551 = sbr.rel (%p2549) target = $region105
        $region104: #{tpu_custom_call.1} parent=92 // pred_region
          %s2552 = sand.u32 %s28, 1
          %s2553 = scalar_lea.sflag [#allocation7], %s2552
          %s2554 = sand.u32 %s156, 1
          %s2555 = smul.addr %s2554, 32
          %s2556 = scalar_lea.vmem [#allocation8], %s2555
          %2557 = dma.done %s2553, 512
        $region105: #{tpu_custom_call.1} parent=92 // pred_fallthru
          _
        // Predicated region
        $region106: #{tpu_custom_call.1} parent=92 // pred_check
          %p2558 = pneg %p197
        $region107: #{tpu_custom_call.1} parent=92 // pred_check_branch
          %2560 = sbr.rel (%p2558) target = $region109
        $region108: #{tpu_custom_call.1} parent=92 // pred_region
          %s2561 = sand.u32 %s182, 1
          %s2562 = scalar_lea.sflag [#allocation10], %s2561
          %s2563 = sand.u32 %s182, 1
          %s2564 = smul.addr %s2563, 2
          %s2565 = scalar_lea.vmem [#allocation9], %s2564
          %2566 = dma.done %s2562, 32
        $region109: #{tpu_custom_call.1} parent=92 // pred_fallthru
          _
      $region93: #{tpu_custom_call.1} parent=5 // pred_fallthru
        _
    $region6: #{tpu_custom_call.1} parent=1 // loop_footer
      %s26 = sadd.s32 1, %s22
    $region7: #{tpu_custom_call.1} parent=1 // loop_footer_branch
      %21 = sbr.rel target = $region3
    $region8: #{tpu_custom_call.1} parent=1 // loop_exit
      _
    %2567 = vsyncpa [#allocation5], 1
    %s2568 = scalar_lea.sflag [#allocation5], 1
    %2569 = vsyncpa %s2568, 1
    %2570 = vsyncpa [#allocation7], 1
    %s2571 = scalar_lea.sflag [#allocation7], 1
    %2572 = vsyncpa %s2571, 1
    %2573 = vsyncpa [#allocation10], 1
    %s2574 = scalar_lea.sflag [#allocation10], 1
    %2575 = vsyncpa %s2574, 1

</llo_original>
